<compile_context>
chip_gen: v7x
topology: tpu7x:2x2x1
jax: 0.10.0
libtpu: 0.0.40
codegen_flags: <defaults>
</compile_context>

<pallas_src>
import numpy as np
import jax
import jax.numpy as jnp
from jax import lax
from jax.experimental import pallas as pl

# ---- hyperparameters (small, consistent with the module) ----
BATCH = 2
LOOK_BACK = 8            # T
INPUT_SIZE = 8
HIDDEN = 32              # hidden_size == cnn_input_size (required by the module)
NUM_LAYERS = 2
OUT_SIZE = 4
CONV_CH = 16
HP = HIDDEN // 2         # pooled spatial length
FC1_OUT = 64
LN_EPS = 1e-5
H4 = 4 * HIDDEN
HALF = CONV_CH * HP      # 256
VEC_W = 2 * HALF         # 512


# ---------------------------------------------------------------------------
# Kernel: one invocation, fully unrolled; only h @ W_hh sits on the serial
# chain.  Head = LayerNorm -> fused conv/ReLU/maxpool matmul -> fc1 -> fc2.
# ---------------------------------------------------------------------------
def lstm_cnn_kernel(x_ref, w_ref, vecs_ref, conv_ref, fc1_ref, fc2_ref, out_ref):
    f32, bf16 = jnp.float32, jnp.bfloat16

    # --- small packed row vectors (single operand / single DMA) ---
    vecs = vecs_ref[...]
    bias0 = vecs[0:1, 0:H4]          # pre-summed b_ih + b_hh, layer 0
    bias1 = vecs[1:2, 0:H4]          # layer 1
    gamma = vecs[2:3, 0:HIDDEN]
    beta = vecs[3:4, 0:HIDDEN]
    cb = vecs[4:5, :]                # conv bias, duplicated for even|odd halves
    b1 = vecs[5:6, 0:FC1_OUT]
    b2 = vecs[6:7, 0:OUT_SIZE]

    # --- LSTM weights (bf16), fused-gate layout (in, 4H), PyTorch gate order ---
    w_ih0 = w_ref[0]                 # (32, 128), layer-0 input rows zero-padded
    w_hh0 = w_ref[1]                 # (32, 128)
    w_ih1 = w_ref[2]                 # (32, 128)
    w_hh1 = w_ref[3]                 # (32, 128)

    def run_layer(proj, w_hh, collect_seq):
        """proj: (T*B, 4H) f32, bias already folded in.  Serial part = h @ W_hh only."""
        h = jnp.zeros((BATCH, HIDDEN), f32)
        c = jnp.zeros((BATCH, HIDDEN), f32)
        hs = []
        for t in range(LOOK_BACK):   # unrolled: LLO can overlap EUP with next MXU push
            g = proj[t * BATCH:(t + 1) * BATCH, :] + jnp.dot(
                h.astype(bf16), w_hh, preferred_element_type=f32)      # (B, 4H)
            sg = jax.nn.sigmoid(g)   # one 128-lane sigmoid
            tg = jnp.tanh(g)         # one 128-lane tanh
            i_g = sg[:, 0 * HIDDEN:1 * HIDDEN]
            f_g = sg[:, 1 * HIDDEN:2 * HIDDEN]
            g_g = tg[:, 2 * HIDDEN:3 * HIDDEN]
            o_g = sg[:, 3 * HIDDEN:4 * HIDDEN]
            c = f_g * c + i_g * g_g
            h = o_g * jnp.tanh(c)
            if collect_seq:
                hs.append(h)
        seq = jnp.concatenate(hs, axis=0) if collect_seq else None      # (T*B, H)
        return seq, h

    # ---- layer 0: one batched (T*B,32)x(32,128) input projection, then recurrence ----
    proj0 = jnp.dot(x_ref[...], w_ih0, preferred_element_type=f32) + bias0
    hseq0, _ = run_layer(proj0, w_hh0, collect_seq=True)

    # ---- layer 1: batched projection of layer-0's whole h sequence, then recurrence ----
    proj1 = jnp.dot(hseq0.astype(bf16), w_ih1, preferred_element_type=f32) + bias1
    _, h_top = run_layer(proj1, w_hh1, collect_seq=False)               # (B, H)

    # ---- LayerNorm on the last hidden state (f32) ----
    mean = jnp.mean(h_top, axis=-1, keepdims=True)
    cent = h_top - mean
    var = jnp.mean(cent * cent, axis=-1, keepdims=True)
    ln = cent * lax.rsqrt(var + LN_EPS) * gamma + beta                  # (B, H)

    # ---- conv1d(k=3,pad=1) + ReLU + maxpool(2): ONE (B,32)x(32,512) matmul ----
    y = jnp.maximum(
        jnp.dot(ln.astype(bf16), conv_ref[...], preferred_element_type=f32) + cb, 0.0)
    pooled = jnp.maximum(y[:, :HALF], y[:, HALF:])                      # (B, 256)

    # ---- fc1 -> ReLU -> fc2 ----
    d1 = jnp.maximum(
        jnp.dot(pooled.astype(bf16), fc1_ref[...], preferred_element_type=f32) + b1, 0.0)
    out = jnp.dot(d1.astype(bf16), fc2_ref[...], preferred_element_type=f32) + b2
    out_ref[...] = out.astype(out_ref.dtype)


# Built once at module scope (no grid: every operand is a whole-array VMEM block).
_lstm_cnn_call = pl.pallas_call(
    lstm_cnn_kernel,
    out_shape=jax.ShapeDtypeStruct((BATCH, OUT_SIZE), jnp.float32),
)


# ---------------------------------------------------------------------------
# Parameter init (deterministic, PyTorch layouts).
# ---------------------------------------------------------------------------
def init_params(key):
    s = 1.0 / np.sqrt(HIDDEN)
    keys = jax.random.split(key, 8 + 4 * NUM_LAYERS)
    p = {"w_ih": [], "w_hh": [], "b_ih": [], "b_hh": []}
    idx = 0
    for l in range(NUM_LAYERS):
        in_dim = INPUT_SIZE if l == 0 else HIDDEN
        p["w_ih"].append(jax.random.uniform(keys[idx], (4 * HIDDEN, in_dim), jnp.float32, -s, s)); idx += 1
        p["w_hh"].append(jax.random.uniform(keys[idx], (4 * HIDDEN, HIDDEN), jnp.float32, -s, s)); idx += 1
        p["b_ih"].append(jax.random.uniform(keys[idx], (4 * HIDDEN,), jnp.float32, -s, s)); idx += 1
        p["b_hh"].append(jax.random.uniform(keys[idx], (4 * HIDDEN,), jnp.float32, -s, s)); idx += 1
    p["gamma"] = jnp.ones((HIDDEN,), jnp.float32)
    p["beta"] = jnp.zeros((HIDDEN,), jnp.float32)
    p["conv_w"] = jax.random.uniform(keys[idx], (CONV_CH, 3), jnp.float32, -0.5, 0.5); idx += 1
    p["conv_b"] = jax.random.uniform(keys[idx], (CONV_CH,), jnp.float32, -0.5, 0.5); idx += 1
    p["fc1_w"] = jax.random.uniform(keys[idx], (FC1_OUT, CONV_CH * HP), jnp.float32, -0.1, 0.1); idx += 1
    p["fc1_b"] = jax.random.uniform(keys[idx], (FC1_OUT,), jnp.float32, -0.1, 0.1); idx += 1
    p["fc2_w"] = jax.random.uniform(keys[idx], (OUT_SIZE, FC1_OUT), jnp.float32, -0.1, 0.1); idx += 1
    p["fc2_b"] = jax.random.uniform(keys[idx], (OUT_SIZE,), jnp.float32, -0.1, 0.1); idx += 1
    return p


# ---------------------------------------------------------------------------
# One-time packing (run at init, NOT per forward).
# ---------------------------------------------------------------------------
def pack_params(p):
    # LSTM: fused-gate (in, 4H) layout, PyTorch gate order (i, f, g, o);
    # layer-0 input dim zero-padded to HIDDEN; all four stacked -> (4, 32, 128) bf16.
    wi0 = jnp.pad(p["w_ih"][0].T, ((0, HIDDEN - INPUT_SIZE), (0, 0)))
    lstm_w = jnp.stack([wi0, p["w_hh"][0].T, p["w_ih"][1].T, p["w_hh"][1].T]).astype(jnp.bfloat16)

    # Fold conv1d weights + boundary zero-padding + even/odd deinterleave into one
    # (32, 512) matrix: cols [0:256] = conv output at position 2p, [256:512] = 2p+1,
    # channel-major within each half (col = ch*HP + p) == torch NCW flatten order.
    cw = np.asarray(p["conv_w"], np.float32)
    cbv = np.asarray(p["conv_b"], np.float32)
    a = np.zeros((HIDDEN, VEC_W), np.float32)
    cb_row = np.zeros((VEC_W,), np.float32)
    for ch in range(CONV_CH):
        for pos in range(HP):
            ce = ch * HP + pos
            co = HALF + ch * HP + pos
            cb_row[ce] = cbv[ch]
            cb_row[co] = cbv[ch]
            for k in range(3):
                he = 2 * pos - 1 + k        # conv output position 2*pos
                if 0 <= he < HIDDEN:
                    a[he, ce] += cw[ch, k]
                ho = 2 * pos + k            # conv output position 2*pos + 1
                if 0 <= ho < HIDDEN:
                    a[ho, co] += cw[ch, k]
    conv_a = jnp.asarray(a).astype(jnp.bfloat16)

    # All small row vectors packed into one (8, 512) f32 operand (one DMA).
    vecs = np.zeros((8, VEC_W), np.float32)
    vecs[0, :H4] = np.asarray(p["b_ih"][0] + p["b_hh"][0])
    vecs[1, :H4] = np.asarray(p["b_ih"][1] + p["b_hh"][1])
    vecs[2, :HIDDEN] = np.asarray(p["gamma"])
    vecs[3, :HIDDEN] = np.asarray(p["beta"])
    vecs[4, :] = cb_row
    vecs[5, :FC1_OUT] = np.asarray(p["fc1_b"])
    vecs[6, :OUT_SIZE] = np.asarray(p["fc2_b"])
    vecs = jnp.asarray(vecs)

    fc1_w = p["fc1_w"].T.astype(jnp.bfloat16)   # (256, 64), rows already channel-major
    fc2_w = p["fc2_w"].T.astype(jnp.bfloat16)   # (64, 4)
    return (lstm_w, vecs, conv_a, fc1_w, fc2_w)


@jax.jit
def pallas_forward(x, packed):
    lstm_w, vecs, conv_a, fc1_w, fc2_w = packed
    # time-major, batch-flattened (T*B, INPUT), feature-padded to HIDDEN, bf16 for MXU
    xt = jnp.transpose(x.astype(jnp.float32), (1, 0, 2)).reshape(LOOK_BACK * BATCH, INPUT_SIZE)
    xt = jnp.pad(xt, ((0, 0), (0, HIDDEN - INPUT_SIZE))).astype(jnp.bfloat16)
    return _lstm_cnn_call(xt, lstm_w, vecs, conv_a, fc1_w, fc2_w)


# ---------------------------------------------------------------------------
# Pure-JAX reference (mirrors the PyTorch forward) for the correctness check.
# ---------------------------------------------------------------------------
def reference_forward(x, p):
    HI = jax.lax.Precision.HIGHEST
    B, T, _ = x.shape
    h = [jnp.zeros((B, HIDDEN), jnp.float32) for _ in range(NUM_LAYERS)]
    c = [jnp.zeros((B, HIDDEN), jnp.float32) for _ in range(NUM_LAYERS)]
    for t in range(T):
        inp = x[:, t, :]
        for l in range(NUM_LAYERS):
            g = (jnp.dot(inp, p["w_ih"][l].T, precision=HI)
                 + jnp.dot(h[l], p["w_hh"][l].T, precision=HI)
                 + p["b_ih"][l] + p["b_hh"][l])
            i_ = jax.nn.sigmoid(g[:, 0:HIDDEN])
            f_ = jax.nn.sigmoid(g[:, HIDDEN:2 * HIDDEN])
            gg = jnp.tanh(g[:, 2 * HIDDEN:3 * HIDDEN])
            o_ = jax.nn.sigmoid(g[:, 3 * HIDDEN:4 * HIDDEN])
            c[l] = f_ * c[l] + i_ * gg
            h[l] = o_ * jnp.tanh(c[l])
            inp = h[l]
    last = h[NUM_LAYERS - 1]
    mean = last.mean(-1, keepdims=True)
    var = ((last - mean) ** 2).mean(-1, keepdims=True)
    ln = (last - mean) / jnp.sqrt(var + LN_EPS) * p["gamma"] + p["beta"]
    pad = jnp.pad(ln, ((0, 0), (1, 1)))
    taps = jnp.stack([pad[:, 0:HIDDEN], pad[:, 1:HIDDEN + 1], pad[:, 2:HIDDEN + 2]], axis=-1)
    y = jnp.einsum("bhk,ck->bch", taps, p["conv_w"], precision=HI) + p["conv_b"][None, :, None]
    y = jnp.maximum(y, 0.0)
    pooled = jnp.max(y.reshape(BATCH, CONV_CH, HP, 2), axis=-1)
    flat = pooled.reshape(BATCH, CONV_CH * HP)
    d1 = jnp.maximum(jnp.dot(flat, p["fc1_w"].T, precision=HI) + p["fc1_b"], 0.0)
    return jnp.dot(d1, p["fc2_w"].T, precision=HI) + p["fc2_b"]


if __name__ == "__main__":
    key = jax.random.PRNGKey(0)
    k_x, k_p = jax.random.split(key)
    x = jax.random.normal(k_x, (BATCH, LOOK_BACK, INPUT_SIZE), jnp.float32)
    params = init_params(k_p)

    packed = pack_params(params)          # one-time packing at init (not per call)
    out = jax.block_until_ready(pallas_forward(x, packed))

    ref = jax.block_until_ready(reference_forward(x, params))
    # bf16 MXU operands (per perf review; accumulation stays f32) => tolerance
    # loosened vs the HIGHEST-precision f32 reference.
    np.testing.assert_allclose(np.asarray(out), np.asarray(ref), rtol=3e-2, atol=3e-2)

    print("KERNEL_OK")
</pallas_src>

<mosaic_0001>
module attributes {stable_mosaic.version = 11 : i64} {
  func.func @lstm_cnn_kernel(%arg0: memref<16x32xbf16, #tpu.memory_space<vmem>>, %arg1: memref<4x32x128xbf16, #tpu.memory_space<vmem>>, %arg2: memref<8x512xf32, #tpu.memory_space<vmem>>, %arg3: memref<32x512xbf16, #tpu.memory_space<vmem>>, %arg4: memref<256x64xbf16, #tpu.memory_space<vmem>>, %arg5: memref<64x4xbf16, #tpu.memory_space<vmem>>, %arg6: memref<2x4xf32, #tpu.memory_space<vmem>>) attributes {dimension_semantics = [], scalar_prefetch = 0 : i64, scratch_operands = 0 : i64, tpu.core_type = #tpu.core_type<tc>} {
    %c0 = arith.constant 0 : index
    %c0_0 = arith.constant 0 : index
    %0 = vector.load %arg2[%c0, %c0_0] : memref<8x512xf32, #tpu.memory_space<vmem>>, vector<8x512xf32>
    %1 = vector.extract_strided_slice %0 {offsets = [0, 0], sizes = [1, 128], strides = [1, 1]} : vector<8x512xf32> to vector<1x128xf32>
    %2 = vector.extract_strided_slice %0 {offsets = [1, 0], sizes = [1, 128], strides = [1, 1]} : vector<8x512xf32> to vector<1x128xf32>
    %3 = vector.extract_strided_slice %0 {offsets = [2, 0], sizes = [1, 32], strides = [1, 1]} : vector<8x512xf32> to vector<1x32xf32>
    %4 = vector.extract_strided_slice %0 {offsets = [3, 0], sizes = [1, 32], strides = [1, 1]} : vector<8x512xf32> to vector<1x32xf32>
    %5 = vector.extract_strided_slice %0 {offsets = [4, 0], sizes = [1, 512], strides = [1, 1]} : vector<8x512xf32> to vector<1x512xf32>
    %6 = vector.extract_strided_slice %0 {offsets = [5, 0], sizes = [1, 64], strides = [1, 1]} : vector<8x512xf32> to vector<1x64xf32>
    %7 = vector.extract_strided_slice %0 {offsets = [6, 0], sizes = [1, 4], strides = [1, 1]} : vector<8x512xf32> to vector<1x4xf32>
    %c0_1 = arith.constant 0 : index
    %c0_2 = arith.constant 0 : index
    %c0_3 = arith.constant 0 : index
    %8 = vector.load %arg1[%c0_1, %c0_2, %c0_3] : memref<4x32x128xbf16, #tpu.memory_space<vmem>>, vector<1x32x128xbf16>
    %9 = vector.shape_cast %8 : vector<1x32x128xbf16> to vector<32x128xbf16>
    %c1 = arith.constant 1 : index
    %c0_4 = arith.constant 0 : index
    %c0_5 = arith.constant 0 : index
    %10 = vector.load %arg1[%c1, %c0_4, %c0_5] : memref<4x32x128xbf16, #tpu.memory_space<vmem>>, vector<1x32x128xbf16>
    %11 = vector.shape_cast %10 : vector<1x32x128xbf16> to vector<32x128xbf16>
    %c2 = arith.constant 2 : index
    %c0_6 = arith.constant 0 : index
    %c0_7 = arith.constant 0 : index
    %12 = vector.load %arg1[%c2, %c0_6, %c0_7] : memref<4x32x128xbf16, #tpu.memory_space<vmem>>, vector<1x32x128xbf16>
    %13 = vector.shape_cast %12 : vector<1x32x128xbf16> to vector<32x128xbf16>
    %c3 = arith.constant 3 : index
    %c0_8 = arith.constant 0 : index
    %c0_9 = arith.constant 0 : index
    %14 = vector.load %arg1[%c3, %c0_8, %c0_9] : memref<4x32x128xbf16, #tpu.memory_space<vmem>>, vector<1x32x128xbf16>
    %15 = vector.shape_cast %14 : vector<1x32x128xbf16> to vector<32x128xbf16>
    %c0_10 = arith.constant 0 : index
    %c0_11 = arith.constant 0 : index
    %16 = vector.load %arg0[%c0_10, %c0_11] : memref<16x32xbf16, #tpu.memory_space<vmem>>, vector<16x32xbf16>
    %cst = arith.constant dense<0.000000e+00> : vector<16x128xf32>
    %17 = tpu.matmul %16, %9, %cst {dimension_numbers = #tpu.dot_dimension_numbers<[1], [0], [0], [1], [0, 0, 1, 1], [], []>} : vector<16x32xbf16>, vector<32x128xbf16>, vector<16x128xf32> -> vector<16x128xf32>
    %18 = vector.broadcast %1 : vector<1x128xf32> to vector<16x128xf32>
    %19 = arith.addf %17, %18 : vector<16x128xf32>
    %cst_12 = arith.constant 0.000000e+00 : f32
    %20 = vector.broadcast %cst_12 : f32 to vector<2x32xf32>
    %cst_13 = arith.constant 0.000000e+00 : f32
    %21 = vector.broadcast %cst_13 : f32 to vector<2x32xf32>
    %22 = vector.extract_strided_slice %19 {offsets = [0, 0], sizes = [2, 128], strides = [1, 1]} : vector<16x128xf32> to vector<2x128xf32>
    %23 = arith.truncf %20 : vector<2x32xf32> to vector<2x32xbf16>
    %cst_14 = arith.constant dense<0.000000e+00> : vector<2x128xf32>
    %24 = tpu.matmul %23, %11, %cst_14 {dimension_numbers = #tpu.dot_dimension_numbers<[1], [0], [0], [1], [0, 0, 1, 1], [], []>} : vector<2x32xbf16>, vector<32x128xbf16>, vector<2x128xf32> -> vector<2x128xf32>
    %25 = arith.addf %22, %24 : vector<2x128xf32>
    %26 = arith.negf %25 : vector<2x128xf32>
    %27 = math.exp %26 : vector<2x128xf32>
    %cst_15 = arith.constant 1.000000e+00 : f32
    %28 = vector.broadcast %cst_15 : f32 to vector<2x128xf32>
    %29 = arith.addf %28, %27 : vector<2x128xf32>
    %30 = arith.divf %28, %29 : vector<2x128xf32>
    %31 = math.tanh %25 : vector<2x128xf32>
    %32 = vector.extract_strided_slice %30 {offsets = [0, 0], sizes = [2, 32], strides = [1, 1]} : vector<2x128xf32> to vector<2x32xf32>
    %33 = vector.extract_strided_slice %30 {offsets = [0, 32], sizes = [2, 32], strides = [1, 1]} : vector<2x128xf32> to vector<2x32xf32>
    %34 = vector.extract_strided_slice %31 {offsets = [0, 64], sizes = [2, 32], strides = [1, 1]} : vector<2x128xf32> to vector<2x32xf32>
    %35 = vector.extract_strided_slice %30 {offsets = [0, 96], sizes = [2, 32], strides = [1, 1]} : vector<2x128xf32> to vector<2x32xf32>
    %36 = arith.mulf %33, %21 : vector<2x32xf32>
    %37 = arith.mulf %32, %34 : vector<2x32xf32>
    %38 = arith.addf %36, %37 : vector<2x32xf32>
    %39 = math.tanh %38 : vector<2x32xf32>
    %40 = arith.mulf %35, %39 : vector<2x32xf32>
    %41 = vector.extract_strided_slice %19 {offsets = [2, 0], sizes = [2, 128], strides = [1, 1]} : vector<16x128xf32> to vector<2x128xf32>
    %42 = arith.truncf %40 : vector<2x32xf32> to vector<2x32xbf16>
    %cst_16 = arith.constant dense<0.000000e+00> : vector<2x128xf32>
    %43 = tpu.matmul %42, %11, %cst_16 {dimension_numbers = #tpu.dot_dimension_numbers<[1], [0], [0], [1], [0, 0, 1, 1], [], []>} : vector<2x32xbf16>, vector<32x128xbf16>, vector<2x128xf32> -> vector<2x128xf32>
    %44 = arith.addf %41, %43 : vector<2x128xf32>
    %45 = arith.negf %44 : vector<2x128xf32>
    %46 = math.exp %45 : vector<2x128xf32>
    %cst_17 = arith.constant 1.000000e+00 : f32
    %47 = vector.broadcast %cst_17 : f32 to vector<2x128xf32>
    %48 = arith.addf %47, %46 : vector<2x128xf32>
    %49 = arith.divf %47, %48 : vector<2x128xf32>
    %50 = math.tanh %44 : vector<2x128xf32>
    %51 = vector.extract_strided_slice %49 {offsets = [0, 0], sizes = [2, 32], strides = [1, 1]} : vector<2x128xf32> to vector<2x32xf32>
    %52 = vector.extract_strided_slice %49 {offsets = [0, 32], sizes = [2, 32], strides = [1, 1]} : vector<2x128xf32> to vector<2x32xf32>
    %53 = vector.extract_strided_slice %50 {offsets = [0, 64], sizes = [2, 32], strides = [1, 1]} : vector<2x128xf32> to vector<2x32xf32>
    %54 = vector.extract_strided_slice %49 {offsets = [0, 96], sizes = [2, 32], strides = [1, 1]} : vector<2x128xf32> to vector<2x32xf32>
    %55 = arith.mulf %52, %38 : vector<2x32xf32>
    %56 = arith.mulf %51, %53 : vector<2x32xf32>
    %57 = arith.addf %55, %56 : vector<2x32xf32>
    %58 = math.tanh %57 : vector<2x32xf32>
    %59 = arith.mulf %54, %58 : vector<2x32xf32>
    %60 = vector.extract_strided_slice %19 {offsets = [4, 0], sizes = [2, 128], strides = [1, 1]} : vector<16x128xf32> to vector<2x128xf32>
    %61 = arith.truncf %59 : vector<2x32xf32> to vector<2x32xbf16>
    %cst_18 = arith.constant dense<0.000000e+00> : vector<2x128xf32>
    %62 = tpu.matmul %61, %11, %cst_18 {dimension_numbers = #tpu.dot_dimension_numbers<[1], [0], [0], [1], [0, 0, 1, 1], [], []>} : vector<2x32xbf16>, vector<32x128xbf16>, vector<2x128xf32> -> vector<2x128xf32>
    %63 = arith.addf %60, %62 : vector<2x128xf32>
    %64 = arith.negf %63 : vector<2x128xf32>
    %65 = math.exp %64 : vector<2x128xf32>
    %cst_19 = arith.constant 1.000000e+00 : f32
    %66 = vector.broadcast %cst_19 : f32 to vector<2x128xf32>
    %67 = arith.addf %66, %65 : vector<2x128xf32>
    %68 = arith.divf %66, %67 : vector<2x128xf32>
    %69 = math.tanh %63 : vector<2x128xf32>
    %70 = vector.extract_strided_slice %68 {offsets = [0, 0], sizes = [2, 32], strides = [1, 1]} : vector<2x128xf32> to vector<2x32xf32>
    %71 = vector.extract_strided_slice %68 {offsets = [0, 32], sizes = [2, 32], strides = [1, 1]} : vector<2x128xf32> to vector<2x32xf32>
    %72 = vector.extract_strided_slice %69 {offsets = [0, 64], sizes = [2, 32], strides = [1, 1]} : vector<2x128xf32> to vector<2x32xf32>
    %73 = vector.extract_strided_slice %68 {offsets = [0, 96], sizes = [2, 32], strides = [1, 1]} : vector<2x128xf32> to vector<2x32xf32>
    %74 = arith.mulf %71, %57 : vector<2x32xf32>
    %75 = arith.mulf %70, %72 : vector<2x32xf32>
    %76 = arith.addf %74, %75 : vector<2x32xf32>
    %77 = math.tanh %76 : vector<2x32xf32>
    %78 = arith.mulf %73, %77 : vector<2x32xf32>
    %79 = vector.extract_strided_slice %19 {offsets = [6, 0], sizes = [2, 128], strides = [1, 1]} : vector<16x128xf32> to vector<2x128xf32>
    %80 = arith.truncf %78 : vector<2x32xf32> to vector<2x32xbf16>
    %cst_20 = arith.constant dense<0.000000e+00> : vector<2x128xf32>
    %81 = tpu.matmul %80, %11, %cst_20 {dimension_numbers = #tpu.dot_dimension_numbers<[1], [0], [0], [1], [0, 0, 1, 1], [], []>} : vector<2x32xbf16>, vector<32x128xbf16>, vector<2x128xf32> -> vector<2x128xf32>
    %82 = arith.addf %79, %81 : vector<2x128xf32>
    %83 = arith.negf %82 : vector<2x128xf32>
    %84 = math.exp %83 : vector<2x128xf32>
    %cst_21 = arith.constant 1.000000e+00 : f32
    %85 = vector.broadcast %cst_21 : f32 to vector<2x128xf32>
    %86 = arith.addf %85, %84 : vector<2x128xf32>
    %87 = arith.divf %85, %86 : vector<2x128xf32>
    %88 = math.tanh %82 : vector<2x128xf32>
    %89 = vector.extract_strided_slice %87 {offsets = [0, 0], sizes = [2, 32], strides = [1, 1]} : vector<2x128xf32> to vector<2x32xf32>
    %90 = vector.extract_strided_slice %87 {offsets = [0, 32], sizes = [2, 32], strides = [1, 1]} : vector<2x128xf32> to vector<2x32xf32>
    %91 = vector.extract_strided_slice %88 {offsets = [0, 64], sizes = [2, 32], strides = [1, 1]} : vector<2x128xf32> to vector<2x32xf32>
    %92 = vector.extract_strided_slice %87 {offsets = [0, 96], sizes = [2, 32], strides = [1, 1]} : vector<2x128xf32> to vector<2x32xf32>
    %93 = arith.mulf %90, %76 : vector<2x32xf32>
    %94 = arith.mulf %89, %91 : vector<2x32xf32>
    %95 = arith.addf %93, %94 : vector<2x32xf32>
    %96 = math.tanh %95 : vector<2x32xf32>
    %97 = arith.mulf %92, %96 : vector<2x32xf32>
    %98 = vector.extract_strided_slice %19 {offsets = [8, 0], sizes = [2, 128], strides = [1, 1]} : vector<16x128xf32> to vector<2x128xf32>
    %99 = arith.truncf %97 : vector<2x32xf32> to vector<2x32xbf16>
    %cst_22 = arith.constant dense<0.000000e+00> : vector<2x128xf32>
    %100 = tpu.matmul %99, %11, %cst_22 {dimension_numbers = #tpu.dot_dimension_numbers<[1], [0], [0], [1], [0, 0, 1, 1], [], []>} : vector<2x32xbf16>, vector<32x128xbf16>, vector<2x128xf32> -> vector<2x128xf32>
    %101 = arith.addf %98, %100 : vector<2x128xf32>
    %102 = arith.negf %101 : vector<2x128xf32>
    %103 = math.exp %102 : vector<2x128xf32>
    %cst_23 = arith.constant 1.000000e+00 : f32
    %104 = vector.broadcast %cst_23 : f32 to vector<2x128xf32>
    %105 = arith.addf %104, %103 : vector<2x128xf32>
    %106 = arith.divf %104, %105 : vector<2x128xf32>
    %107 = math.tanh %101 : vector<2x128xf32>
    %108 = vector.extract_strided_slice %106 {offsets = [0, 0], sizes = [2, 32], strides = [1, 1]} : vector<2x128xf32> to vector<2x32xf32>
    %109 = vector.extract_strided_slice %106 {offsets = [0, 32], sizes = [2, 32], strides = [1, 1]} : vector<2x128xf32> to vector<2x32xf32>
    %110 = vector.extract_strided_slice %107 {offsets = [0, 64], sizes = [2, 32], strides = [1, 1]} : vector<2x128xf32> to vector<2x32xf32>
    %111 = vector.extract_strided_slice %106 {offsets = [0, 96], sizes = [2, 32], strides = [1, 1]} : vector<2x128xf32> to vector<2x32xf32>
    %112 = arith.mulf %109, %95 : vector<2x32xf32>
    %113 = arith.mulf %108, %110 : vector<2x32xf32>
    %114 = arith.addf %112, %113 : vector<2x32xf32>
    %115 = math.tanh %114 : vector<2x32xf32>
    %116 = arith.mulf %111, %115 : vector<2x32xf32>
    %117 = vector.extract_strided_slice %19 {offsets = [10, 0], sizes = [2, 128], strides = [1, 1]} : vector<16x128xf32> to vector<2x128xf32>
    %118 = arith.truncf %116 : vector<2x32xf32> to vector<2x32xbf16>
    %cst_24 = arith.constant dense<0.000000e+00> : vector<2x128xf32>
    %119 = tpu.matmul %118, %11, %cst_24 {dimension_numbers = #tpu.dot_dimension_numbers<[1], [0], [0], [1], [0, 0, 1, 1], [], []>} : vector<2x32xbf16>, vector<32x128xbf16>, vector<2x128xf32> -> vector<2x128xf32>
    %120 = arith.addf %117, %119 : vector<2x128xf32>
    %121 = arith.negf %120 : vector<2x128xf32>
    %122 = math.exp %121 : vector<2x128xf32>
    %cst_25 = arith.constant 1.000000e+00 : f32
    %123 = vector.broadcast %cst_25 : f32 to vector<2x128xf32>
    %124 = arith.addf %123, %122 : vector<2x128xf32>
    %125 = arith.divf %123, %124 : vector<2x128xf32>
    %126 = math.tanh %120 : vector<2x128xf32>
    %127 = vector.extract_strided_slice %125 {offsets = [0, 0], sizes = [2, 32], strides = [1, 1]} : vector<2x128xf32> to vector<2x32xf32>
    %128 = vector.extract_strided_slice %125 {offsets = [0, 32], sizes = [2, 32], strides = [1, 1]} : vector<2x128xf32> to vector<2x32xf32>
    %129 = vector.extract_strided_slice %126 {offsets = [0, 64], sizes = [2, 32], strides = [1, 1]} : vector<2x128xf32> to vector<2x32xf32>
    %130 = vector.extract_strided_slice %125 {offsets = [0, 96], sizes = [2, 32], strides = [1, 1]} : vector<2x128xf32> to vector<2x32xf32>
    %131 = arith.mulf %128, %114 : vector<2x32xf32>
    %132 = arith.mulf %127, %129 : vector<2x32xf32>
    %133 = arith.addf %131, %132 : vector<2x32xf32>
    %134 = math.tanh %133 : vector<2x32xf32>
    %135 = arith.mulf %130, %134 : vector<2x32xf32>
    %136 = vector.extract_strided_slice %19 {offsets = [12, 0], sizes = [2, 128], strides = [1, 1]} : vector<16x128xf32> to vector<2x128xf32>
    %137 = arith.truncf %135 : vector<2x32xf32> to vector<2x32xbf16>
    %cst_26 = arith.constant dense<0.000000e+00> : vector<2x128xf32>
    %138 = tpu.matmul %137, %11, %cst_26 {dimension_numbers = #tpu.dot_dimension_numbers<[1], [0], [0], [1], [0, 0, 1, 1], [], []>} : vector<2x32xbf16>, vector<32x128xbf16>, vector<2x128xf32> -> vector<2x128xf32>
    %139 = arith.addf %136, %138 : vector<2x128xf32>
    %140 = arith.negf %139 : vector<2x128xf32>
    %141 = math.exp %140 : vector<2x128xf32>
    %cst_27 = arith.constant 1.000000e+00 : f32
    %142 = vector.broadcast %cst_27 : f32 to vector<2x128xf32>
    %143 = arith.addf %142, %141 : vector<2x128xf32>
    %144 = arith.divf %142, %143 : vector<2x128xf32>
    %145 = math.tanh %139 : vector<2x128xf32>
    %146 = vector.extract_strided_slice %144 {offsets = [0, 0], sizes = [2, 32], strides = [1, 1]} : vector<2x128xf32> to vector<2x32xf32>
    %147 = vector.extract_strided_slice %144 {offsets = [0, 32], sizes = [2, 32], strides = [1, 1]} : vector<2x128xf32> to vector<2x32xf32>
    %148 = vector.extract_strided_slice %145 {offsets = [0, 64], sizes = [2, 32], strides = [1, 1]} : vector<2x128xf32> to vector<2x32xf32>
    %149 = vector.extract_strided_slice %144 {offsets = [0, 96], sizes = [2, 32], strides = [1, 1]} : vector<2x128xf32> to vector<2x32xf32>
    %150 = arith.mulf %147, %133 : vector<2x32xf32>
    %151 = arith.mulf %146, %148 : vector<2x32xf32>
    %152 = arith.addf %150, %151 : vector<2x32xf32>
    %153 = math.tanh %152 : vector<2x32xf32>
    %154 = arith.mulf %149, %153 : vector<2x32xf32>
    %155 = vector.extract_strided_slice %19 {offsets = [14, 0], sizes = [2, 128], strides = [1, 1]} : vector<16x128xf32> to vector<2x128xf32>
    %156 = arith.truncf %154 : vector<2x32xf32> to vector<2x32xbf16>
    %cst_28 = arith.constant dense<0.000000e+00> : vector<2x128xf32>
    %157 = tpu.matmul %156, %11, %cst_28 {dimension_numbers = #tpu.dot_dimension_numbers<[1], [0], [0], [1], [0, 0, 1, 1], [], []>} : vector<2x32xbf16>, vector<32x128xbf16>, vector<2x128xf32> -> vector<2x128xf32>
    %158 = arith.addf %155, %157 : vector<2x128xf32>
    %159 = arith.negf %158 : vector<2x128xf32>
    %160 = math.exp %159 : vector<2x128xf32>
    %cst_29 = arith.constant 1.000000e+00 : f32
    %161 = vector.broadcast %cst_29 : f32 to vector<2x128xf32>
    %162 = arith.addf %161, %160 : vector<2x128xf32>
    %163 = arith.divf %161, %162 : vector<2x128xf32>
    %164 = math.tanh %158 : vector<2x128xf32>
    %165 = vector.extract_strided_slice %163 {offsets = [0, 0], sizes = [2, 32], strides = [1, 1]} : vector<2x128xf32> to vector<2x32xf32>
    %166 = vector.extract_strided_slice %163 {offsets = [0, 32], sizes = [2, 32], strides = [1, 1]} : vector<2x128xf32> to vector<2x32xf32>
    %167 = vector.extract_strided_slice %164 {offsets = [0, 64], sizes = [2, 32], strides = [1, 1]} : vector<2x128xf32> to vector<2x32xf32>
    %168 = vector.extract_strided_slice %163 {offsets = [0, 96], sizes = [2, 32], strides = [1, 1]} : vector<2x128xf32> to vector<2x32xf32>
    %169 = arith.mulf %166, %152 : vector<2x32xf32>
    %170 = arith.mulf %165, %167 : vector<2x32xf32>
    %171 = arith.addf %169, %170 : vector<2x32xf32>
    %172 = math.tanh %171 : vector<2x32xf32>
    %173 = arith.mulf %168, %172 : vector<2x32xf32>
    %174 = tpu.concatenate %40, %59, %78, %97, %116, %135, %154, %173 in 0 : vector<2x32xf32>, vector<2x32xf32>, vector<2x32xf32>, vector<2x32xf32>, vector<2x32xf32>, vector<2x32xf32>, vector<2x32xf32>, vector<2x32xf32> -> vector<16x32xf32>
    %175 = arith.truncf %174 : vector<16x32xf32> to vector<16x32xbf16>
    %cst_30 = arith.constant dense<0.000000e+00> : vector<16x128xf32>
    %176 = tpu.matmul %175, %13, %cst_30 {dimension_numbers = #tpu.dot_dimension_numbers<[1], [0], [0], [1], [0, 0, 1, 1], [], []>} : vector<16x32xbf16>, vector<32x128xbf16>, vector<16x128xf32> -> vector<16x128xf32>
    %177 = vector.broadcast %2 : vector<1x128xf32> to vector<16x128xf32>
    %178 = arith.addf %176, %177 : vector<16x128xf32>
    %cst_31 = arith.constant 0.000000e+00 : f32
    %179 = vector.broadcast %cst_31 : f32 to vector<2x32xf32>
    %cst_32 = arith.constant 0.000000e+00 : f32
    %180 = vector.broadcast %cst_32 : f32 to vector<2x32xf32>
    %181 = vector.extract_strided_slice %178 {offsets = [0, 0], sizes = [2, 128], strides = [1, 1]} : vector<16x128xf32> to vector<2x128xf32>
    %182 = arith.truncf %179 : vector<2x32xf32> to vector<2x32xbf16>
    %cst_33 = arith.constant dense<0.000000e+00> : vector<2x128xf32>
    %183 = tpu.matmul %182, %15, %cst_33 {dimension_numbers = #tpu.dot_dimension_numbers<[1], [0], [0], [1], [0, 0, 1, 1], [], []>} : vector<2x32xbf16>, vector<32x128xbf16>, vector<2x128xf32> -> vector<2x128xf32>
    %184 = arith.addf %181, %183 : vector<2x128xf32>
    %185 = arith.negf %184 : vector<2x128xf32>
    %186 = math.exp %185 : vector<2x128xf32>
    %cst_34 = arith.constant 1.000000e+00 : f32
    %187 = vector.broadcast %cst_34 : f32 to vector<2x128xf32>
    %188 = arith.addf %187, %186 : vector<2x128xf32>
    %189 = arith.divf %187, %188 : vector<2x128xf32>
    %190 = math.tanh %184 : vector<2x128xf32>
    %191 = vector.extract_strided_slice %189 {offsets = [0, 0], sizes = [2, 32], strides = [1, 1]} : vector<2x128xf32> to vector<2x32xf32>
    %192 = vector.extract_strided_slice %189 {offsets = [0, 32], sizes = [2, 32], strides = [1, 1]} : vector<2x128xf32> to vector<2x32xf32>
    %193 = vector.extract_strided_slice %190 {offsets = [0, 64], sizes = [2, 32], strides = [1, 1]} : vector<2x128xf32> to vector<2x32xf32>
    %194 = vector.extract_strided_slice %189 {offsets = [0, 96], sizes = [2, 32], strides = [1, 1]} : vector<2x128xf32> to vector<2x32xf32>
    %195 = arith.mulf %192, %180 : vector<2x32xf32>
    %196 = arith.mulf %191, %193 : vector<2x32xf32>
    %197 = arith.addf %195, %196 : vector<2x32xf32>
    %198 = math.tanh %197 : vector<2x32xf32>
    %199 = arith.mulf %194, %198 : vector<2x32xf32>
    %200 = vector.extract_strided_slice %178 {offsets = [2, 0], sizes = [2, 128], strides = [1, 1]} : vector<16x128xf32> to vector<2x128xf32>
    %201 = arith.truncf %199 : vector<2x32xf32> to vector<2x32xbf16>
    %cst_35 = arith.constant dense<0.000000e+00> : vector<2x128xf32>
    %202 = tpu.matmul %201, %15, %cst_35 {dimension_numbers = #tpu.dot_dimension_numbers<[1], [0], [0], [1], [0, 0, 1, 1], [], []>} : vector<2x32xbf16>, vector<32x128xbf16>, vector<2x128xf32> -> vector<2x128xf32>
    %203 = arith.addf %200, %202 : vector<2x128xf32>
    %204 = arith.negf %203 : vector<2x128xf32>
    %205 = math.exp %204 : vector<2x128xf32>
    %cst_36 = arith.constant 1.000000e+00 : f32
    %206 = vector.broadcast %cst_36 : f32 to vector<2x128xf32>
    %207 = arith.addf %206, %205 : vector<2x128xf32>
    %208 = arith.divf %206, %207 : vector<2x128xf32>
    %209 = math.tanh %203 : vector<2x128xf32>
    %210 = vector.extract_strided_slice %208 {offsets = [0, 0], sizes = [2, 32], strides = [1, 1]} : vector<2x128xf32> to vector<2x32xf32>
    %211 = vector.extract_strided_slice %208 {offsets = [0, 32], sizes = [2, 32], strides = [1, 1]} : vector<2x128xf32> to vector<2x32xf32>
    %212 = vector.extract_strided_slice %209 {offsets = [0, 64], sizes = [2, 32], strides = [1, 1]} : vector<2x128xf32> to vector<2x32xf32>
    %213 = vector.extract_strided_slice %208 {offsets = [0, 96], sizes = [2, 32], strides = [1, 1]} : vector<2x128xf32> to vector<2x32xf32>
    %214 = arith.mulf %211, %197 : vector<2x32xf32>
    %215 = arith.mulf %210, %212 : vector<2x32xf32>
    %216 = arith.addf %214, %215 : vector<2x32xf32>
    %217 = math.tanh %216 : vector<2x32xf32>
    %218 = arith.mulf %213, %217 : vector<2x32xf32>
    %219 = vector.extract_strided_slice %178 {offsets = [4, 0], sizes = [2, 128], strides = [1, 1]} : vector<16x128xf32> to vector<2x128xf32>
    %220 = arith.truncf %218 : vector<2x32xf32> to vector<2x32xbf16>
    %cst_37 = arith.constant dense<0.000000e+00> : vector<2x128xf32>
    %221 = tpu.matmul %220, %15, %cst_37 {dimension_numbers = #tpu.dot_dimension_numbers<[1], [0], [0], [1], [0, 0, 1, 1], [], []>} : vector<2x32xbf16>, vector<32x128xbf16>, vector<2x128xf32> -> vector<2x128xf32>
    %222 = arith.addf %219, %221 : vector<2x128xf32>
    %223 = arith.negf %222 : vector<2x128xf32>
    %224 = math.exp %223 : vector<2x128xf32>
    %cst_38 = arith.constant 1.000000e+00 : f32
    %225 = vector.broadcast %cst_38 : f32 to vector<2x128xf32>
    %226 = arith.addf %225, %224 : vector<2x128xf32>
    %227 = arith.divf %225, %226 : vector<2x128xf32>
    %228 = math.tanh %222 : vector<2x128xf32>
    %229 = vector.extract_strided_slice %227 {offsets = [0, 0], sizes = [2, 32], strides = [1, 1]} : vector<2x128xf32> to vector<2x32xf32>
    %230 = vector.extract_strided_slice %227 {offsets = [0, 32], sizes = [2, 32], strides = [1, 1]} : vector<2x128xf32> to vector<2x32xf32>
    %231 = vector.extract_strided_slice %228 {offsets = [0, 64], sizes = [2, 32], strides = [1, 1]} : vector<2x128xf32> to vector<2x32xf32>
    %232 = vector.extract_strided_slice %227 {offsets = [0, 96], sizes = [2, 32], strides = [1, 1]} : vector<2x128xf32> to vector<2x32xf32>
    %233 = arith.mulf %230, %216 : vector<2x32xf32>
    %234 = arith.mulf %229, %231 : vector<2x32xf32>
    %235 = arith.addf %233, %234 : vector<2x32xf32>
    %236 = math.tanh %235 : vector<2x32xf32>
    %237 = arith.mulf %232, %236 : vector<2x32xf32>
    %238 = vector.extract_strided_slice %178 {offsets = [6, 0], sizes = [2, 128], strides = [1, 1]} : vector<16x128xf32> to vector<2x128xf32>
    %239 = arith.truncf %237 : vector<2x32xf32> to vector<2x32xbf16>
    %cst_39 = arith.constant dense<0.000000e+00> : vector<2x128xf32>
    %240 = tpu.matmul %239, %15, %cst_39 {dimension_numbers = #tpu.dot_dimension_numbers<[1], [0], [0], [1], [0, 0, 1, 1], [], []>} : vector<2x32xbf16>, vector<32x128xbf16>, vector<2x128xf32> -> vector<2x128xf32>
    %241 = arith.addf %238, %240 : vector<2x128xf32>
    %242 = arith.negf %241 : vector<2x128xf32>
    %243 = math.exp %242 : vector<2x128xf32>
    %cst_40 = arith.constant 1.000000e+00 : f32
    %244 = vector.broadcast %cst_40 : f32 to vector<2x128xf32>
    %245 = arith.addf %244, %243 : vector<2x128xf32>
    %246 = arith.divf %244, %245 : vector<2x128xf32>
    %247 = math.tanh %241 : vector<2x128xf32>
    %248 = vector.extract_strided_slice %246 {offsets = [0, 0], sizes = [2, 32], strides = [1, 1]} : vector<2x128xf32> to vector<2x32xf32>
    %249 = vector.extract_strided_slice %246 {offsets = [0, 32], sizes = [2, 32], strides = [1, 1]} : vector<2x128xf32> to vector<2x32xf32>
    %250 = vector.extract_strided_slice %247 {offsets = [0, 64], sizes = [2, 32], strides = [1, 1]} : vector<2x128xf32> to vector<2x32xf32>
    %251 = vector.extract_strided_slice %246 {offsets = [0, 96], sizes = [2, 32], strides = [1, 1]} : vector<2x128xf32> to vector<2x32xf32>
    %252 = arith.mulf %249, %235 : vector<2x32xf32>
    %253 = arith.mulf %248, %250 : vector<2x32xf32>
    %254 = arith.addf %252, %253 : vector<2x32xf32>
    %255 = math.tanh %254 : vector<2x32xf32>
    %256 = arith.mulf %251, %255 : vector<2x32xf32>
    %257 = vector.extract_strided_slice %178 {offsets = [8, 0], sizes = [2, 128], strides = [1, 1]} : vector<16x128xf32> to vector<2x128xf32>
    %258 = arith.truncf %256 : vector<2x32xf32> to vector<2x32xbf16>
    %cst_41 = arith.constant dense<0.000000e+00> : vector<2x128xf32>
    %259 = tpu.matmul %258, %15, %cst_41 {dimension_numbers = #tpu.dot_dimension_numbers<[1], [0], [0], [1], [0, 0, 1, 1], [], []>} : vector<2x32xbf16>, vector<32x128xbf16>, vector<2x128xf32> -> vector<2x128xf32>
    %260 = arith.addf %257, %259 : vector<2x128xf32>
    %261 = arith.negf %260 : vector<2x128xf32>
    %262 = math.exp %261 : vector<2x128xf32>
    %cst_42 = arith.constant 1.000000e+00 : f32
    %263 = vector.broadcast %cst_42 : f32 to vector<2x128xf32>
    %264 = arith.addf %263, %262 : vector<2x128xf32>
    %265 = arith.divf %263, %264 : vector<2x128xf32>
    %266 = math.tanh %260 : vector<2x128xf32>
    %267 = vector.extract_strided_slice %265 {offsets = [0, 0], sizes = [2, 32], strides = [1, 1]} : vector<2x128xf32> to vector<2x32xf32>
    %268 = vector.extract_strided_slice %265 {offsets = [0, 32], sizes = [2, 32], strides = [1, 1]} : vector<2x128xf32> to vector<2x32xf32>
    %269 = vector.extract_strided_slice %266 {offsets = [0, 64], sizes = [2, 32], strides = [1, 1]} : vector<2x128xf32> to vector<2x32xf32>
    %270 = vector.extract_strided_slice %265 {offsets = [0, 96], sizes = [2, 32], strides = [1, 1]} : vector<2x128xf32> to vector<2x32xf32>
    %271 = arith.mulf %268, %254 : vector<2x32xf32>
    %272 = arith.mulf %267, %269 : vector<2x32xf32>
    %273 = arith.addf %271, %272 : vector<2x32xf32>
    %274 = math.tanh %273 : vector<2x32xf32>
    %275 = arith.mulf %270, %274 : vector<2x32xf32>
    %276 = vector.extract_strided_slice %178 {offsets = [10, 0], sizes = [2, 128], strides = [1, 1]} : vector<16x128xf32> to vector<2x128xf32>
    %277 = arith.truncf %275 : vector<2x32xf32> to vector<2x32xbf16>
    %cst_43 = arith.constant dense<0.000000e+00> : vector<2x128xf32>
    %278 = tpu.matmul %277, %15, %cst_43 {dimension_numbers = #tpu.dot_dimension_numbers<[1], [0], [0], [1], [0, 0, 1, 1], [], []>} : vector<2x32xbf16>, vector<32x128xbf16>, vector<2x128xf32> -> vector<2x128xf32>
    %279 = arith.addf %276, %278 : vector<2x128xf32>
    %280 = arith.negf %279 : vector<2x128xf32>
    %281 = math.exp %280 : vector<2x128xf32>
    %cst_44 = arith.constant 1.000000e+00 : f32
    %282 = vector.broadcast %cst_44 : f32 to vector<2x128xf32>
    %283 = arith.addf %282, %281 : vector<2x128xf32>
    %284 = arith.divf %282, %283 : vector<2x128xf32>
    %285 = math.tanh %279 : vector<2x128xf32>
    %286 = vector.extract_strided_slice %284 {offsets = [0, 0], sizes = [2, 32], strides = [1, 1]} : vector<2x128xf32> to vector<2x32xf32>
    %287 = vector.extract_strided_slice %284 {offsets = [0, 32], sizes = [2, 32], strides = [1, 1]} : vector<2x128xf32> to vector<2x32xf32>
    %288 = vector.extract_strided_slice %285 {offsets = [0, 64], sizes = [2, 32], strides = [1, 1]} : vector<2x128xf32> to vector<2x32xf32>
    %289 = vector.extract_strided_slice %284 {offsets = [0, 96], sizes = [2, 32], strides = [1, 1]} : vector<2x128xf32> to vector<2x32xf32>
    %290 = arith.mulf %287, %273 : vector<2x32xf32>
    %291 = arith.mulf %286, %288 : vector<2x32xf32>
    %292 = arith.addf %290, %291 : vector<2x32xf32>
    %293 = math.tanh %292 : vector<2x32xf32>
    %294 = arith.mulf %289, %293 : vector<2x32xf32>
    %295 = vector.extract_strided_slice %178 {offsets = [12, 0], sizes = [2, 128], strides = [1, 1]} : vector<16x128xf32> to vector<2x128xf32>
    %296 = arith.truncf %294 : vector<2x32xf32> to vector<2x32xbf16>
    %cst_45 = arith.constant dense<0.000000e+00> : vector<2x128xf32>
    %297 = tpu.matmul %296, %15, %cst_45 {dimension_numbers = #tpu.dot_dimension_numbers<[1], [0], [0], [1], [0, 0, 1, 1], [], []>} : vector<2x32xbf16>, vector<32x128xbf16>, vector<2x128xf32> -> vector<2x128xf32>
    %298 = arith.addf %295, %297 : vector<2x128xf32>
    %299 = arith.negf %298 : vector<2x128xf32>
    %300 = math.exp %299 : vector<2x128xf32>
    %cst_46 = arith.constant 1.000000e+00 : f32
    %301 = vector.broadcast %cst_46 : f32 to vector<2x128xf32>
    %302 = arith.addf %301, %300 : vector<2x128xf32>
    %303 = arith.divf %301, %302 : vector<2x128xf32>
    %304 = math.tanh %298 : vector<2x128xf32>
    %305 = vector.extract_strided_slice %303 {offsets = [0, 0], sizes = [2, 32], strides = [1, 1]} : vector<2x128xf32> to vector<2x32xf32>
    %306 = vector.extract_strided_slice %303 {offsets = [0, 32], sizes = [2, 32], strides = [1, 1]} : vector<2x128xf32> to vector<2x32xf32>
    %307 = vector.extract_strided_slice %304 {offsets = [0, 64], sizes = [2, 32], strides = [1, 1]} : vector<2x128xf32> to vector<2x32xf32>
    %308 = vector.extract_strided_slice %303 {offsets = [0, 96], sizes = [2, 32], strides = [1, 1]} : vector<2x128xf32> to vector<2x32xf32>
    %309 = arith.mulf %306, %292 : vector<2x32xf32>
    %310 = arith.mulf %305, %307 : vector<2x32xf32>
    %311 = arith.addf %309, %310 : vector<2x32xf32>
    %312 = math.tanh %311 : vector<2x32xf32>
    %313 = arith.mulf %308, %312 : vector<2x32xf32>
    %314 = vector.extract_strided_slice %178 {offsets = [14, 0], sizes = [2, 128], strides = [1, 1]} : vector<16x128xf32> to vector<2x128xf32>
    %315 = arith.truncf %313 : vector<2x32xf32> to vector<2x32xbf16>
    %cst_47 = arith.constant dense<0.000000e+00> : vector<2x128xf32>
    %316 = tpu.matmul %315, %15, %cst_47 {dimension_numbers = #tpu.dot_dimension_numbers<[1], [0], [0], [1], [0, 0, 1, 1], [], []>} : vector<2x32xbf16>, vector<32x128xbf16>, vector<2x128xf32> -> vector<2x128xf32>
    %317 = arith.addf %314, %316 : vector<2x128xf32>
    %318 = arith.negf %317 : vector<2x128xf32>
    %319 = math.exp %318 : vector<2x128xf32>
    %cst_48 = arith.constant 1.000000e+00 : f32
    %320 = vector.broadcast %cst_48 : f32 to vector<2x128xf32>
    %321 = arith.addf %320, %319 : vector<2x128xf32>
    %322 = arith.divf %320, %321 : vector<2x128xf32>
    %323 = math.tanh %317 : vector<2x128xf32>
    %324 = vector.extract_strided_slice %322 {offsets = [0, 0], sizes = [2, 32], strides = [1, 1]} : vector<2x128xf32> to vector<2x32xf32>
    %325 = vector.extract_strided_slice %322 {offsets = [0, 32], sizes = [2, 32], strides = [1, 1]} : vector<2x128xf32> to vector<2x32xf32>
    %326 = vector.extract_strided_slice %323 {offsets = [0, 64], sizes = [2, 32], strides = [1, 1]} : vector<2x128xf32> to vector<2x32xf32>
    %327 = vector.extract_strided_slice %322 {offsets = [0, 96], sizes = [2, 32], strides = [1, 1]} : vector<2x128xf32> to vector<2x32xf32>
    %328 = arith.mulf %325, %311 : vector<2x32xf32>
    %329 = arith.mulf %324, %326 : vector<2x32xf32>
    %330 = arith.addf %328, %329 : vector<2x32xf32>
    %331 = math.tanh %330 : vector<2x32xf32>
    %332 = arith.mulf %327, %331 : vector<2x32xf32>
    %cst_49 = arith.constant dense<0.000000e+00> : vector<2xf32>
    %333 = vector.multi_reduction <add>, %332, %cst_49 [1] : vector<2x32xf32> to vector<2xf32>
    %334 = vector.shape_cast %333 : vector<2xf32> to vector<2x1xf32>
    %cst_50 = arith.constant 3.200000e+01 : f32
    %335 = vector.broadcast %cst_50 : f32 to vector<2x1xf32>
    %336 = arith.divf %334, %335 : vector<2x1xf32>
    %337 = vector.broadcast %336 : vector<2x1xf32> to vector<2x32xf32>
    %338 = arith.subf %332, %337 : vector<2x32xf32>
    %339 = arith.mulf %338, %338 : vector<2x32xf32>
    %cst_51 = arith.constant dense<0.000000e+00> : vector<2xf32>
    %340 = vector.multi_reduction <add>, %339, %cst_51 [1] : vector<2x32xf32> to vector<2xf32>
    %341 = vector.shape_cast %340 : vector<2xf32> to vector<2x1xf32>
    %cst_52 = arith.constant 3.200000e+01 : f32
    %342 = vector.broadcast %cst_52 : f32 to vector<2x1xf32>
    %343 = arith.divf %341, %342 : vector<2x1xf32>
    %cst_53 = arith.constant 9.99999974E-6 : f32
    %344 = vector.broadcast %cst_53 : f32 to vector<2x1xf32>
    %345 = arith.addf %343, %344 : vector<2x1xf32>
    %346 = math.rsqrt %345 : vector<2x1xf32>
    %347 = vector.broadcast %346 : vector<2x1xf32> to vector<2x32xf32>
    %348 = arith.mulf %338, %347 : vector<2x32xf32>
    %349 = vector.broadcast %3 : vector<1x32xf32> to vector<2x32xf32>
    %350 = arith.mulf %348, %349 : vector<2x32xf32>
    %351 = vector.broadcast %4 : vector<1x32xf32> to vector<2x32xf32>
    %352 = arith.addf %350, %351 : vector<2x32xf32>
    %353 = arith.truncf %352 : vector<2x32xf32> to vector<2x32xbf16>
    %c0_54 = arith.constant 0 : index
    %c0_55 = arith.constant 0 : index
    %354 = vector.load %arg3[%c0_54, %c0_55] : memref<32x512xbf16, #tpu.memory_space<vmem>>, vector<32x512xbf16>
    %cst_56 = arith.constant dense<0.000000e+00> : vector<2x512xf32>
    %355 = tpu.matmul %353, %354, %cst_56 {dimension_numbers = #tpu.dot_dimension_numbers<[1], [0], [0], [1], [0, 0, 1, 1], [], []>} : vector<2x32xbf16>, vector<32x512xbf16>, vector<2x512xf32> -> vector<2x512xf32>
    %356 = vector.broadcast %5 : vector<1x512xf32> to vector<2x512xf32>
    %357 = arith.addf %355, %356 : vector<2x512xf32>
    %cst_57 = arith.constant 0.000000e+00 : f32
    %358 = vector.broadcast %cst_57 : f32 to vector<2x512xf32>
    %359 = arith.maximumf %357, %358 : vector<2x512xf32>
    %360 = vector.extract_strided_slice %359 {offsets = [0, 0], sizes = [2, 256], strides = [1, 1]} : vector<2x512xf32> to vector<2x256xf32>
    %361 = vector.extract_strided_slice %359 {offsets = [0, 256], sizes = [2, 256], strides = [1, 1]} : vector<2x512xf32> to vector<2x256xf32>
    %362 = arith.maximumf %360, %361 : vector<2x256xf32>
    %363 = arith.truncf %362 : vector<2x256xf32> to vector<2x256xbf16>
    %c0_58 = arith.constant 0 : index
    %c0_59 = arith.constant 0 : index
    %364 = vector.load %arg4[%c0_58, %c0_59] : memref<256x64xbf16, #tpu.memory_space<vmem>>, vector<256x64xbf16>
    %cst_60 = arith.constant dense<0.000000e+00> : vector<2x64xf32>
    %365 = tpu.matmul %363, %364, %cst_60 {dimension_numbers = #tpu.dot_dimension_numbers<[1], [0], [0], [1], [0, 0, 1, 1], [], []>} : vector<2x256xbf16>, vector<256x64xbf16>, vector<2x64xf32> -> vector<2x64xf32>
    %366 = vector.broadcast %6 : vector<1x64xf32> to vector<2x64xf32>
    %367 = arith.addf %365, %366 : vector<2x64xf32>
    %cst_61 = arith.constant 0.000000e+00 : f32
    %368 = vector.broadcast %cst_61 : f32 to vector<2x64xf32>
    %369 = arith.maximumf %367, %368 : vector<2x64xf32>
    %370 = arith.truncf %369 : vector<2x64xf32> to vector<2x64xbf16>
    %c0_62 = arith.constant 0 : index
    %c0_63 = arith.constant 0 : index
    %371 = vector.load %arg5[%c0_62, %c0_63] : memref<64x4xbf16, #tpu.memory_space<vmem>>, vector<64x4xbf16>
    %cst_64 = arith.constant dense<0.000000e+00> : vector<2x4xf32>
    %372 = tpu.matmul %370, %371, %cst_64 {dimension_numbers = #tpu.dot_dimension_numbers<[1], [0], [0], [1], [0, 0, 1, 1], [], []>} : vector<2x64xbf16>, vector<64x4xbf16>, vector<2x4xf32> -> vector<2x4xf32>
    %373 = vector.broadcast %7 : vector<1x4xf32> to vector<2x4xf32>
    %374 = arith.addf %372, %373 : vector<2x4xf32>
    %c0_65 = arith.constant 0 : index
    %c0_66 = arith.constant 0 : index
    %375 = vector.load %arg6[%c0_65, %c0_66] : memref<2x4xf32, #tpu.memory_space<vmem>>, vector<2x4xf32>
    tpu.vector_store %arg6[%c0_65, %c0_66], %374 {strides = array<i32>} : memref<2x4xf32, #tpu.memory_space<vmem>>, vector<2x4xf32>,
    return
  }
}

</mosaic_0001>

<llo_original>
// kernel: pallas_forward.1
$region0: #{pallas_forward.1}
  #allocation0 [shape = 'u32[]', space=smem, size = 0x4, offset = 0x4, fixed_abs, tag = 'smem constant byte address 0x4 - core index']
  #allocation1 [shape = 'u32[144,128]{1,0:T(1,128)}', space=vmem, size = 0x12000, scoped, tag = 'internal scratch']
  %s0 = inlined_call_operand.vmem [shape: bf16[16,32], index: 0, kind: input, shape index: {}]
  %s1 = inlined_call_operand.vmem [shape: bf16[4,32,128], index: 1, kind: input, shape index: {}]
  %s2 = inlined_call_operand.vmem [shape: f32[8,512], index: 2, kind: input, shape index: {}]
  %s3 = inlined_call_operand.vmem [shape: bf16[32,512], index: 3, kind: input, shape index: {}]
  %s4 = inlined_call_operand.vmem [shape: bf16[256,64], index: 4, kind: input, shape index: {}]
  %s5 = inlined_call_operand.vmem [shape: bf16[64,4], index: 5, kind: input, shape index: {}]
  %s6 = inlined_call_operand.hbm [shape: f32[2,4], index: 6, kind: output, shape index: {}]
  %s7 = sld [smem:[#allocation0]]
  $region34: #{pallas_forward.1} parent=0
    _
  %s9 = ssub.s32 1, %s7
  %s10 = scalar_select 0, %s9, %s7
  $region1: #{pallas_forward.1} parent=0
    #allocation2 [shape = 'u8[1024]{0}', space=vmem, size = 0x400, scoped, tag = 'output window, operand 0, single buffered']
    #allocation3 [shape = 's32[1]{0}', space=sflag, size = 0x4, scoped, tag = 'scoped memory for pallas_forward.1']
    %11 = vsyncpa [#allocation3], 0
    // Predicated region
    $region2: #{pallas_forward.1} parent=1 // pred_check
      _
    $region3: #{pallas_forward.1} parent=1 // pred_check_branch
      %13 = sbr.rel (0) target = $region5
    $region4: #{pallas_forward.1} parent=1 // pred_region
      _
    $region5: #{pallas_forward.1} parent=1 // pred_fallthru
      _
    // Predicated region
    $region6: #{pallas_forward.1} parent=1 // pred_check
      _
    $region7: #{pallas_forward.1} parent=1 // pred_check_branch
      %15 = sbr.rel (0) target = $region9
    $region8: #{pallas_forward.1} parent=1 // pred_region
      _
    $region9: #{pallas_forward.1} parent=1 // pred_fallthru
      _
    // Predicated region
    $region10: #{pallas_forward.1} parent=1 // pred_check
      _
    $region11: #{pallas_forward.1} parent=1 // pred_check_branch
      %17 = sbr.rel (0) target = $region13
    $region12: #{pallas_forward.1} parent=1 // pred_region
      _
    $region13: #{pallas_forward.1} parent=1 // pred_fallthru
      _
    // Predicated region
    $region14: #{pallas_forward.1} parent=1 // pred_check
      _
    $region15: #{pallas_forward.1} parent=1 // pred_check_branch
      %19 = sbr.rel (0) target = $region17
    $region16: #{pallas_forward.1} parent=1 // pred_region
      _
    $region17: #{pallas_forward.1} parent=1 // pred_fallthru
      _
    // Predicated region
    $region18: #{pallas_forward.1} parent=1 // pred_check
      _
    $region19: #{pallas_forward.1} parent=1 // pred_check_branch
      %21 = sbr.rel (0) target = $region21
    $region20: #{pallas_forward.1} parent=1 // pred_region
      _
    $region21: #{pallas_forward.1} parent=1 // pred_fallthru
      _
    // Predicated region
    $region22: #{pallas_forward.1} parent=1 // pred_check
      _
    $region23: #{pallas_forward.1} parent=1 // pred_check_branch
      %23 = sbr.rel (0) target = $region25
    $region24: #{pallas_forward.1} parent=1 // pred_region
      _
    $region25: #{pallas_forward.1} parent=1 // pred_fallthru
      _
    %v25 = vld [vmem:[%s2] sm:$0xff]
    %v26 = vld [vmem:[%s2 + $0x8] sm:$0xff]
    %v27 = vld [vmem:[%s2 + $0x10] sm:$0xff]
    %v28 = vld [vmem:[%s2 + $0x18] sm:$0xff]
    %v29 = vld [vmem:[%s1] sm:$0xf]
    %v30 = vld [vmem:[%s1 + $0x4] sm:$0xf]
    %v31 = vld [vmem:[%s1 + $0x8] sm:$0xf]
    %v32 = vld [vmem:[%s1 + $0xc] sm:$0xf]
    %s33 = scalar_lea.vmem %s1, 16
    %v34 = vld [vmem:[%s33] sm:$0xf]
    %v35 = vld [vmem:[%s33 + $0x4] sm:$0xf]
    %v36 = vld [vmem:[%s33 + $0x8] sm:$0xf]
    %v37 = vld [vmem:[%s33 + $0xc] sm:$0xf]
    %s38 = scalar_lea.vmem %s1, 32
    %v39 = vld [vmem:[%s38] sm:$0xf]
    %v40 = vld [vmem:[%s38 + $0x4] sm:$0xf]
    %v41 = vld [vmem:[%s38 + $0x8] sm:$0xf]
    %v42 = vld [vmem:[%s38 + $0xc] sm:$0xf]
    %s43 = scalar_lea.vmem %s1, 48
    %v44 = vld [vmem:[%s43] sm:$0xf]
    %v45 = vld [vmem:[%s43 + $0x4] sm:$0xf]
    %v46 = vld [vmem:[%s43 + $0x8] sm:$0xf]
    %v47 = vld [vmem:[%s43 + $0xc] sm:$0xf]
    %v48 = vld [vmem:[%s0] sm:$0xf]
    %v49 = vld [vmem:[%s0 + $0x4] sm:$0xf]
    %v50 = vlaneseq
    %v51 = vshrl.u32 %v50, 7
    %v52 = vsub.s32 0, %v51
    %v53 = vrot.slane %v25, %v52
    %v56 = vunpack.c.l.b16 %v48
    %v57 = vunpack.c.l.b16 %v49
    %v58 = vpack.c.b16 %v57, %v56
    %v63 = vunpack.c.l.b16 %v29
    %v64 = vunpack.c.l.b16 %v30
    %v65 = vunpack.c.l.b16 %v31
    %v66 = vunpack.c.l.b16 %v32
    %v67 = vpack.c.b16 %v64, %v63
    %v68 = vpack.c.b16 %v66, %v65
    %vm71 = vcmask 261120
    %v73 = vsel %vm71, %v58, 0
    %75 = vmatprep.subr.bf16.mxu0 0
    %76 = vmatpush1.bf16.msra.mxu0 %v67
    %77 = vmatprep.subr.bf16.mxu0 0
    %78 = vmatpush1.bf16.msra.mxu0 %v68
    %79 = vmatprep.subr.bf16.mxu0 0
    %80 = vmatpush1.bf16.msra.mxu0 0
    %81 = vmatprep.subr.bf16.mxu0 0
    %82 = vmatpush1.bf16.msra.mxu0 0
    %83 = vmatprep.subr.bf16.mxu0 0
    %84 = vmatpush1.bf16.msra.mxu0 0
    %85 = vmatprep.subr.bf16.mxu0 0
    %86 = vmatpush1.bf16.msra.mxu0 0
    %87 = vmatprep.subr.bf16.mxu0 0
    %88 = vmatpush1.bf16.msra.mxu0 0
    %89 = vmatprep.subr.bf16.mxu0 0
    %90 = vmatpush1.bf16.msra.mxu0 0
    %91 = vmatprep.subr.bf16.mxu0 0
    %92 = vmatpush1.bf16.msra.mxu0 0
    %93 = vmatprep.subr.bf16.mxu0 0
    %94 = vmatpush1.bf16.msra.mxu0 0
    %95 = vmatprep.subr.bf16.mxu0 0
    %96 = vmatpush1.bf16.msra.mxu0 0
    %97 = vmatprep.subr.bf16.mxu0 0
    %98 = vmatpush1.bf16.msra.mxu0 0
    %99 = vmatprep.subr.bf16.mxu0 0
    %100 = vmatpush1.bf16.msra.mxu0 0
    %101 = vmatprep.subr.bf16.mxu0 0
    %102 = vmatpush1.bf16.msra.mxu0 0
    %103 = vmatprep.subr.bf16.mxu0 0
    %104 = vmatpush1.bf16.msra.mxu0 0
    %105 = vmatprep.subr.bf16.mxu0 0
    %106 = vmatpush1.bf16.msra.mxu0 0
    %107 = vmatprep.mubr.bf16.mxu0 0
    %108 = vmatmul.mubr.bf16.gmra.mrb[0].mxu0 %v73
    %v109 = vpop.f32.mrb[0].mxu0
    %v110 = vadd.f32 %v53, %v109
    %v111 = vpop.f32.mrb[0].mxu0
    %v112 = vpop.f32.mrb[0].mxu0
    %v113 = vadd.f32 %v53, %v112
    %v114 = vpop.f32.mrb[0].mxu0
    %115 = vdwg.mxu0
    %v120 = vunpack.c.l.b16 %v34
    %v121 = vunpack.c.l.b16 %v35
    %v122 = vunpack.c.l.b16 %v36
    %v123 = vunpack.c.l.b16 %v37
    %v124 = vpack.c.b16 %v121, %v120
    %v125 = vpack.c.b16 %v123, %v122
    %v129 = vsel %vm71, 0, 0
    %131 = vmatprep.subr.bf16.mxu0 0
    %132 = vmatpush1.bf16.msra.mxu0 %v124
    %133 = vmatprep.subr.bf16.mxu0 0
    %134 = vmatpush1.bf16.msra.mxu0 %v125
    %135 = vmatprep.subr.bf16.mxu0 0
    %136 = vmatpush1.bf16.msra.mxu0 0
    %137 = vmatprep.subr.bf16.mxu0 0
    %138 = vmatpush1.bf16.msra.mxu0 0
    %139 = vmatprep.subr.bf16.mxu0 0
    %140 = vmatpush1.bf16.msra.mxu0 0
    %141 = vmatprep.subr.bf16.mxu0 0
    %142 = vmatpush1.bf16.msra.mxu0 0
    %143 = vmatprep.subr.bf16.mxu0 0
    %144 = vmatpush1.bf16.msra.mxu0 0
    %145 = vmatprep.subr.bf16.mxu0 0
    %146 = vmatpush1.bf16.msra.mxu0 0
    %147 = vmatprep.subr.bf16.mxu0 0
    %148 = vmatpush1.bf16.msra.mxu0 0
    %149 = vmatprep.subr.bf16.mxu0 0
    %150 = vmatpush1.bf16.msra.mxu0 0
    %151 = vmatprep.subr.bf16.mxu0 0
    %152 = vmatpush1.bf16.msra.mxu0 0
    %153 = vmatprep.subr.bf16.mxu0 0
    %154 = vmatpush1.bf16.msra.mxu0 0
    %155 = vmatprep.subr.bf16.mxu0 0
    %156 = vmatpush1.bf16.msra.mxu0 0
    %157 = vmatprep.subr.bf16.mxu0 0
    %158 = vmatpush1.bf16.msra.mxu0 0
    %159 = vmatprep.subr.bf16.mxu0 0
    %160 = vmatpush1.bf16.msra.mxu0 0
    %161 = vmatprep.subr.bf16.mxu0 0
    %162 = vmatpush1.bf16.msra.mxu0 0
    %163 = vmatprep.mubr.bf16.mxu0 0
    %164 = vmatmul.mubr.bf16.gmra.mrb[0].mxu0 %v129
    %v165 = vpop.f32.mrb[0].mxu0
    %v166 = vadd.f32 0.0, %v165
    %v167 = vpop.f32.mrb[0].mxu0
    %v168 = vpop.f32.mrb[0].mxu0
    %v169 = vpop.f32.mrb[0].mxu0
    %170 = vdwg.mxu0
    %v171 = vadd.f32 %v110, %v166
    %v172 = vxor.u32 %v171, 2147483648
    %v173 = vmul.f32 %v172, 1.442695
    %v174 = vpow.pop %v173
    %v175 = vadd.f32 %v174, 1.0
    %v176 = vrcp.pop %v175
    %v177 = vmul.f32 1.0, %v176
    %v178 = vtanh.pop %v171
    %v179 = vmul.f32 %v177, 0.0
    %181 = vrot.lane.b32.xlu0 %v178, 64
    %v182 = vpop.permute.xlu0 %181
    %v184 = vmul.f32 %v177, %v182
    %186 = vrot.lane.b32.xlu0 %v184, 32
    %v187 = vpop.permute.xlu0 %186
    %v189 = vadd.f32 %v179, %v187
    %v190 = vtanh.pop %v189
    %192 = vrot.lane.b32.xlu0 %v190, 64
    %v193 = vpop.permute.xlu0 %192
    %v195 = vmul.f32 %v177, %v193
    %v196 = vpack.c.bf16 %v195, %v195
    %198 = vrot.lane.b32.xlu0 %v196, 32
    %v199 = vpop.permute.xlu0 %198
    %v201 = vsel %vm71, %v199, 0
    %203 = vmatprep.subr.bf16.mxu0 0
    %204 = vmatpush1.bf16.msra.mxu0 %v124
    %205 = vmatprep.subr.bf16.mxu0 0
    %206 = vmatpush1.bf16.msra.mxu0 %v125
    %207 = vmatprep.subr.bf16.mxu0 0
    %208 = vmatpush1.bf16.msra.mxu0 0
    %209 = vmatprep.subr.bf16.mxu0 0
    %210 = vmatpush1.bf16.msra.mxu0 0
    %211 = vmatprep.subr.bf16.mxu0 0
    %212 = vmatpush1.bf16.msra.mxu0 0
    %213 = vmatprep.subr.bf16.mxu0 0
    %214 = vmatpush1.bf16.msra.mxu0 0
    %215 = vmatprep.subr.bf16.mxu0 0
    %216 = vmatpush1.bf16.msra.mxu0 0
    %217 = vmatprep.subr.bf16.mxu0 0
    %218 = vmatpush1.bf16.msra.mxu0 0
    %219 = vmatprep.subr.bf16.mxu0 0
    %220 = vmatpush1.bf16.msra.mxu0 0
    %221 = vmatprep.subr.bf16.mxu0 0
    %222 = vmatpush1.bf16.msra.mxu0 0
    %223 = vmatprep.subr.bf16.mxu0 0
    %224 = vmatpush1.bf16.msra.mxu0 0
    %225 = vmatprep.subr.bf16.mxu0 0
    %226 = vmatpush1.bf16.msra.mxu0 0
    %227 = vmatprep.subr.bf16.mxu0 0
    %228 = vmatpush1.bf16.msra.mxu0 0
    %229 = vmatprep.subr.bf16.mxu0 0
    %230 = vmatpush1.bf16.msra.mxu0 0
    %231 = vmatprep.subr.bf16.mxu0 0
    %232 = vmatpush1.bf16.msra.mxu0 0
    %233 = vmatprep.subr.bf16.mxu0 0
    %234 = vmatpush1.bf16.msra.mxu0 0
    %235 = vmatprep.mubr.bf16.mxu0 0
    %236 = vmatmul.mubr.bf16.gmra.mrb[0].mxu0 %v201
    %v237 = vpop.f32.mrb[0].mxu0
    %v238 = vadd.f32 0.0, %v237
    %v239 = vpop.f32.mrb[0].mxu0
    %v240 = vpop.f32.mrb[0].mxu0
    %v241 = vpop.f32.mrb[0].mxu0
    %242 = vdwg.mxu0
    %v244 = vrot.slane %v238, 6
    %v246 = vadd.f32 %v110, %v244
    %v247 = vxor.u32 %v246, 2147483648
    %v248 = vmul.f32 %v247, 1.442695
    %v249 = vpow.pop %v248
    %v250 = vadd.f32 %v249, 1.0
    %v251 = vrcp.pop %v250
    %v252 = vmul.f32 1.0, %v251
    %v253 = vtanh.pop %v246
    %v255 = vrot.slane %v189, 6
    %v257 = vmul.f32 %v252, %v255
    %259 = vrot.lane.b32.xlu0 %v253, 64
    %v260 = vpop.permute.xlu0 %259
    %v262 = vmul.f32 %v252, %v260
    %264 = vrot.lane.b32.xlu0 %v262, 32
    %v265 = vpop.permute.xlu0 %264
    %v267 = vadd.f32 %v257, %v265
    %v268 = vtanh.pop %v267
    %270 = vrot.lane.b32.xlu0 %v268, 64
    %v271 = vpop.permute.xlu0 %270
    %v273 = vmul.f32 %v252, %v271
    %v274 = vpack.c.bf16 %v273, %v273
    %v276 = vrot.slane %v274, 1
    %277 = vrot.lane.b32.xlu0 %v276, 32
    %v278 = vpop.permute.xlu0 %277
    %v280 = vsel %vm71, %v278, 0
    %282 = vmatprep.subr.bf16.mxu0 0
    %283 = vmatpush1.bf16.msra.mxu0 %v124
    %284 = vmatprep.subr.bf16.mxu0 0
    %285 = vmatpush1.bf16.msra.mxu0 %v125
    %286 = vmatprep.subr.bf16.mxu0 0
    %287 = vmatpush1.bf16.msra.mxu0 0
    %288 = vmatprep.subr.bf16.mxu0 0
    %289 = vmatpush1.bf16.msra.mxu0 0
    %290 = vmatprep.subr.bf16.mxu0 0
    %291 = vmatpush1.bf16.msra.mxu0 0
    %292 = vmatprep.subr.bf16.mxu0 0
    %293 = vmatpush1.bf16.msra.mxu0 0
    %294 = vmatprep.subr.bf16.mxu0 0
    %295 = vmatpush1.bf16.msra.mxu0 0
    %296 = vmatprep.subr.bf16.mxu0 0
    %297 = vmatpush1.bf16.msra.mxu0 0
    %298 = vmatprep.subr.bf16.mxu0 0
    %299 = vmatpush1.bf16.msra.mxu0 0
    %300 = vmatprep.subr.bf16.mxu0 0
    %301 = vmatpush1.bf16.msra.mxu0 0
    %302 = vmatprep.subr.bf16.mxu0 0
    %303 = vmatpush1.bf16.msra.mxu0 0
    %304 = vmatprep.subr.bf16.mxu0 0
    %305 = vmatpush1.bf16.msra.mxu0 0
    %306 = vmatprep.subr.bf16.mxu0 0
    %307 = vmatpush1.bf16.msra.mxu0 0
    %308 = vmatprep.subr.bf16.mxu0 0
    %309 = vmatpush1.bf16.msra.mxu0 0
    %310 = vmatprep.subr.bf16.mxu0 0
    %311 = vmatpush1.bf16.msra.mxu0 0
    %312 = vmatprep.subr.bf16.mxu0 0
    %313 = vmatpush1.bf16.msra.mxu0 0
    %314 = vmatprep.mubr.bf16.mxu0 0
    %315 = vmatmul.mubr.bf16.gmra.mrb[0].mxu0 %v280
    %v316 = vpop.f32.mrb[0].mxu0
    %v317 = vadd.f32 0.0, %v316
    %v318 = vpop.f32.mrb[0].mxu0
    %v319 = vpop.f32.mrb[0].mxu0
    %v320 = vpop.f32.mrb[0].mxu0
    %321 = vdwg.mxu0
    %v323 = vrot.slane %v317, 4
    %v325 = vadd.f32 %v110, %v323
    %v326 = vxor.u32 %v325, 2147483648
    %v327 = vmul.f32 %v326, 1.442695
    %v328 = vpow.pop %v327
    %v329 = vadd.f32 %v328, 1.0
    %v330 = vrcp.pop %v329
    %v331 = vmul.f32 1.0, %v330
    %v332 = vtanh.pop %v325
    %v334 = vrot.slane %v267, 6
    %v336 = vmul.f32 %v331, %v334
    %338 = vrot.lane.b32.xlu0 %v332, 64
    %v339 = vpop.permute.xlu0 %338
    %v341 = vmul.f32 %v331, %v339
    %343 = vrot.lane.b32.xlu0 %v341, 32
    %v344 = vpop.permute.xlu0 %343
    %v346 = vadd.f32 %v336, %v344
    %v347 = vtanh.pop %v346
    %349 = vrot.lane.b32.xlu0 %v347, 64
    %v350 = vpop.permute.xlu0 %349
    %v352 = vmul.f32 %v331, %v350
    %v353 = vpack.c.bf16 %v352, %v352
    %v355 = vrot.slane %v353, 2
    %356 = vrot.lane.b32.xlu0 %v355, 32
    %v357 = vpop.permute.xlu0 %356
    %v359 = vsel %vm71, %v357, 0
    %361 = vmatprep.subr.bf16.mxu0 0
    %362 = vmatpush1.bf16.msra.mxu0 %v124
    %363 = vmatprep.subr.bf16.mxu0 0
    %364 = vmatpush1.bf16.msra.mxu0 %v125
    %365 = vmatprep.subr.bf16.mxu0 0
    %366 = vmatpush1.bf16.msra.mxu0 0
    %367 = vmatprep.subr.bf16.mxu0 0
    %368 = vmatpush1.bf16.msra.mxu0 0
    %369 = vmatprep.subr.bf16.mxu0 0
    %370 = vmatpush1.bf16.msra.mxu0 0
    %371 = vmatprep.subr.bf16.mxu0 0
    %372 = vmatpush1.bf16.msra.mxu0 0
    %373 = vmatprep.subr.bf16.mxu0 0
    %374 = vmatpush1.bf16.msra.mxu0 0
    %375 = vmatprep.subr.bf16.mxu0 0
    %376 = vmatpush1.bf16.msra.mxu0 0
    %377 = vmatprep.subr.bf16.mxu0 0
    %378 = vmatpush1.bf16.msra.mxu0 0
    %379 = vmatprep.subr.bf16.mxu0 0
    %380 = vmatpush1.bf16.msra.mxu0 0
    %381 = vmatprep.subr.bf16.mxu0 0
    %382 = vmatpush1.bf16.msra.mxu0 0
    %383 = vmatprep.subr.bf16.mxu0 0
    %384 = vmatpush1.bf16.msra.mxu0 0
    %385 = vmatprep.subr.bf16.mxu0 0
    %386 = vmatpush1.bf16.msra.mxu0 0
    %387 = vmatprep.subr.bf16.mxu0 0
    %388 = vmatpush1.bf16.msra.mxu0 0
    %389 = vmatprep.subr.bf16.mxu0 0
    %390 = vmatpush1.bf16.msra.mxu0 0
    %391 = vmatprep.subr.bf16.mxu0 0
    %392 = vmatpush1.bf16.msra.mxu0 0
    %393 = vmatprep.mubr.bf16.mxu0 0
    %394 = vmatmul.mubr.bf16.gmra.mrb[0].mxu0 %v359
    %v395 = vpop.f32.mrb[0].mxu0
    %v396 = vadd.f32 0.0, %v395
    %v397 = vpop.f32.mrb[0].mxu0
    %v398 = vpop.f32.mrb[0].mxu0
    %v399 = vpop.f32.mrb[0].mxu0
    %400 = vdwg.mxu0
    %v402 = vrot.slane %v396, 2
    %v404 = vadd.f32 %v110, %v402
    %v405 = vxor.u32 %v404, 2147483648
    %v406 = vmul.f32 %v405, 1.442695
    %v407 = vpow.pop %v406
    %v408 = vadd.f32 %v407, 1.0
    %v409 = vrcp.pop %v408
    %v410 = vmul.f32 1.0, %v409
    %v411 = vtanh.pop %v404
    %v413 = vrot.slane %v346, 6
    %v415 = vmul.f32 %v410, %v413
    %417 = vrot.lane.b32.xlu0 %v411, 64
    %v418 = vpop.permute.xlu0 %417
    %v420 = vmul.f32 %v410, %v418
    %422 = vrot.lane.b32.xlu0 %v420, 32
    %v423 = vpop.permute.xlu0 %422
    %v425 = vadd.f32 %v415, %v423
    %v426 = vtanh.pop %v425
    %428 = vrot.lane.b32.xlu0 %v426, 64
    %v429 = vpop.permute.xlu0 %428
    %v431 = vmul.f32 %v410, %v429
    %v432 = vpack.c.bf16 %v431, %v431
    %v434 = vrot.slane %v432, 3
    %435 = vrot.lane.b32.xlu0 %v434, 32
    %v436 = vpop.permute.xlu0 %435
    %v438 = vsel %vm71, %v436, 0
    %440 = vmatprep.subr.bf16.mxu0 0
    %441 = vmatpush1.bf16.msra.mxu0 %v124
    %442 = vmatprep.subr.bf16.mxu0 0
    %443 = vmatpush1.bf16.msra.mxu0 %v125
    %444 = vmatprep.subr.bf16.mxu0 0
    %445 = vmatpush1.bf16.msra.mxu0 0
    %446 = vmatprep.subr.bf16.mxu0 0
    %447 = vmatpush1.bf16.msra.mxu0 0
    %448 = vmatprep.subr.bf16.mxu0 0
    %449 = vmatpush1.bf16.msra.mxu0 0
    %450 = vmatprep.subr.bf16.mxu0 0
    %451 = vmatpush1.bf16.msra.mxu0 0
    %452 = vmatprep.subr.bf16.mxu0 0
    %453 = vmatpush1.bf16.msra.mxu0 0
    %454 = vmatprep.subr.bf16.mxu0 0
    %455 = vmatpush1.bf16.msra.mxu0 0
    %456 = vmatprep.subr.bf16.mxu0 0
    %457 = vmatpush1.bf16.msra.mxu0 0
    %458 = vmatprep.subr.bf16.mxu0 0
    %459 = vmatpush1.bf16.msra.mxu0 0
    %460 = vmatprep.subr.bf16.mxu0 0
    %461 = vmatpush1.bf16.msra.mxu0 0
    %462 = vmatprep.subr.bf16.mxu0 0
    %463 = vmatpush1.bf16.msra.mxu0 0
    %464 = vmatprep.subr.bf16.mxu0 0
    %465 = vmatpush1.bf16.msra.mxu0 0
    %466 = vmatprep.subr.bf16.mxu0 0
    %467 = vmatpush1.bf16.msra.mxu0 0
    %468 = vmatprep.subr.bf16.mxu0 0
    %469 = vmatpush1.bf16.msra.mxu0 0
    %470 = vmatprep.subr.bf16.mxu0 0
    %471 = vmatpush1.bf16.msra.mxu0 0
    %472 = vmatprep.mubr.bf16.mxu0 0
    %473 = vmatmul.mubr.bf16.gmra.mrb[0].mxu0 %v438
    %v474 = vpop.f32.mrb[0].mxu0
    %v475 = vadd.f32 0.0, %v474
    %v476 = vpop.f32.mrb[0].mxu0
    %v477 = vpop.f32.mrb[0].mxu0
    %v478 = vpop.f32.mrb[0].mxu0
    %479 = vdwg.mxu0
    %v480 = vadd.f32 %v113, %v475
    %v481 = vxor.u32 %v480, 2147483648
    %v482 = vmul.f32 %v481, 1.442695
    %v483 = vpow.pop %v482
    %v484 = vadd.f32 %v483, 1.0
    %v485 = vrcp.pop %v484
    %v486 = vmul.f32 1.0, %v485
    %v487 = vtanh.pop %v480
    %v489 = vrot.slane %v425, 6
    %v491 = vmul.f32 %v486, %v489
    %493 = vrot.lane.b32.xlu0 %v487, 64
    %v494 = vpop.permute.xlu0 %493
    %v496 = vmul.f32 %v486, %v494
    %498 = vrot.lane.b32.xlu0 %v496, 32
    %v499 = vpop.permute.xlu0 %498
    %v501 = vadd.f32 %v491, %v499
    %v502 = vtanh.pop %v501
    %504 = vrot.lane.b32.xlu0 %v502, 64
    %v505 = vpop.permute.xlu0 %504
    %v507 = vmul.f32 %v486, %v505
    %v508 = vpack.c.bf16 %v507, %v507
    %510 = vrot.lane.b32.xlu0 %v508, 32
    %v511 = vpop.permute.xlu0 %510
    %v513 = vsel %vm71, %v511, 0
    %515 = vmatprep.subr.bf16.mxu0 0
    %516 = vmatpush1.bf16.msra.mxu0 %v124
    %517 = vmatprep.subr.bf16.mxu0 0
    %518 = vmatpush1.bf16.msra.mxu0 %v125
    %519 = vmatprep.subr.bf16.mxu0 0
    %520 = vmatpush1.bf16.msra.mxu0 0
    %521 = vmatprep.subr.bf16.mxu0 0
    %522 = vmatpush1.bf16.msra.mxu0 0
    %523 = vmatprep.subr.bf16.mxu0 0
    %524 = vmatpush1.bf16.msra.mxu0 0
    %525 = vmatprep.subr.bf16.mxu0 0
    %526 = vmatpush1.bf16.msra.mxu0 0
    %527 = vmatprep.subr.bf16.mxu0 0
    %528 = vmatpush1.bf16.msra.mxu0 0
    %529 = vmatprep.subr.bf16.mxu0 0
    %530 = vmatpush1.bf16.msra.mxu0 0
    %531 = vmatprep.subr.bf16.mxu0 0
    %532 = vmatpush1.bf16.msra.mxu0 0
    %533 = vmatprep.subr.bf16.mxu0 0
    %534 = vmatpush1.bf16.msra.mxu0 0
    %535 = vmatprep.subr.bf16.mxu0 0
    %536 = vmatpush1.bf16.msra.mxu0 0
    %537 = vmatprep.subr.bf16.mxu0 0
    %538 = vmatpush1.bf16.msra.mxu0 0
    %539 = vmatprep.subr.bf16.mxu0 0
    %540 = vmatpush1.bf16.msra.mxu0 0
    %541 = vmatprep.subr.bf16.mxu0 0
    %542 = vmatpush1.bf16.msra.mxu0 0
    %543 = vmatprep.subr.bf16.mxu0 0
    %544 = vmatpush1.bf16.msra.mxu0 0
    %545 = vmatprep.subr.bf16.mxu0 0
    %546 = vmatpush1.bf16.msra.mxu0 0
    %547 = vmatprep.mubr.bf16.mxu0 0
    %548 = vmatmul.mubr.bf16.gmra.mrb[0].mxu0 %v513
    %v549 = vpop.f32.mrb[0].mxu0
    %v550 = vadd.f32 0.0, %v549
    %v551 = vpop.f32.mrb[0].mxu0
    %v552 = vpop.f32.mrb[0].mxu0
    %v553 = vpop.f32.mrb[0].mxu0
    %554 = vdwg.mxu0
    %v556 = vrot.slane %v550, 6
    %v558 = vadd.f32 %v113, %v556
    %v559 = vxor.u32 %v558, 2147483648
    %v560 = vmul.f32 %v559, 1.442695
    %v561 = vpow.pop %v560
    %v562 = vadd.f32 %v561, 1.0
    %v563 = vrcp.pop %v562
    %v564 = vmul.f32 1.0, %v563
    %v565 = vtanh.pop %v558
    %v567 = vrot.slane %v501, 6
    %v569 = vmul.f32 %v564, %v567
    %571 = vrot.lane.b32.xlu0 %v565, 64
    %v572 = vpop.permute.xlu0 %571
    %v574 = vmul.f32 %v564, %v572
    %576 = vrot.lane.b32.xlu0 %v574, 32
    %v577 = vpop.permute.xlu0 %576
    %v579 = vadd.f32 %v569, %v577
    %v580 = vtanh.pop %v579
    %582 = vrot.lane.b32.xlu0 %v580, 64
    %v583 = vpop.permute.xlu0 %582
    %v585 = vmul.f32 %v564, %v583
    %v586 = vpack.c.bf16 %v585, %v585
    %v588 = vrot.slane %v586, 1
    %589 = vrot.lane.b32.xlu0 %v588, 32
    %v590 = vpop.permute.xlu0 %589
    %v592 = vsel %vm71, %v590, 0
    %594 = vmatprep.subr.bf16.mxu0 0
    %595 = vmatpush1.bf16.msra.mxu0 %v124
    %596 = vmatprep.subr.bf16.mxu0 0
    %597 = vmatpush1.bf16.msra.mxu0 %v125
    %598 = vmatprep.subr.bf16.mxu0 0
    %599 = vmatpush1.bf16.msra.mxu0 0
    %600 = vmatprep.subr.bf16.mxu0 0
    %601 = vmatpush1.bf16.msra.mxu0 0
    %602 = vmatprep.subr.bf16.mxu0 0
    %603 = vmatpush1.bf16.msra.mxu0 0
    %604 = vmatprep.subr.bf16.mxu0 0
    %605 = vmatpush1.bf16.msra.mxu0 0
    %606 = vmatprep.subr.bf16.mxu0 0
    %607 = vmatpush1.bf16.msra.mxu0 0
    %608 = vmatprep.subr.bf16.mxu0 0
    %609 = vmatpush1.bf16.msra.mxu0 0
    %610 = vmatprep.subr.bf16.mxu0 0
    %611 = vmatpush1.bf16.msra.mxu0 0
    %612 = vmatprep.subr.bf16.mxu0 0
    %613 = vmatpush1.bf16.msra.mxu0 0
    %614 = vmatprep.subr.bf16.mxu0 0
    %615 = vmatpush1.bf16.msra.mxu0 0
    %616 = vmatprep.subr.bf16.mxu0 0
    %617 = vmatpush1.bf16.msra.mxu0 0
    %618 = vmatprep.subr.bf16.mxu0 0
    %619 = vmatpush1.bf16.msra.mxu0 0
    %620 = vmatprep.subr.bf16.mxu0 0
    %621 = vmatpush1.bf16.msra.mxu0 0
    %622 = vmatprep.subr.bf16.mxu0 0
    %623 = vmatpush1.bf16.msra.mxu0 0
    %624 = vmatprep.subr.bf16.mxu0 0
    %625 = vmatpush1.bf16.msra.mxu0 0
    %626 = vmatprep.mubr.bf16.mxu0 0
    %627 = vmatmul.mubr.bf16.gmra.mrb[0].mxu0 %v592
    %v628 = vpop.f32.mrb[0].mxu0
    %v629 = vadd.f32 0.0, %v628
    %v630 = vpop.f32.mrb[0].mxu0
    %v631 = vpop.f32.mrb[0].mxu0
    %v632 = vpop.f32.mrb[0].mxu0
    %633 = vdwg.mxu0
    %v635 = vrot.slane %v629, 4
    %v637 = vadd.f32 %v113, %v635
    %v638 = vxor.u32 %v637, 2147483648
    %v639 = vmul.f32 %v638, 1.442695
    %v640 = vpow.pop %v639
    %v641 = vadd.f32 %v640, 1.0
    %v642 = vrcp.pop %v641
    %v643 = vmul.f32 1.0, %v642
    %v644 = vtanh.pop %v637
    %v646 = vrot.slane %v579, 6
    %v648 = vmul.f32 %v643, %v646
    %650 = vrot.lane.b32.xlu0 %v644, 64
    %v651 = vpop.permute.xlu0 %650
    %v653 = vmul.f32 %v643, %v651
    %655 = vrot.lane.b32.xlu0 %v653, 32
    %v656 = vpop.permute.xlu0 %655
    %v658 = vadd.f32 %v648, %v656
    %v659 = vtanh.pop %v658
    %661 = vrot.lane.b32.xlu0 %v659, 64
    %v662 = vpop.permute.xlu0 %661
    %v664 = vmul.f32 %v643, %v662
    %v665 = vpack.c.bf16 %v664, %v664
    %v667 = vrot.slane %v665, 2
    %668 = vrot.lane.b32.xlu0 %v667, 32
    %v669 = vpop.permute.xlu0 %668
    %v671 = vsel %vm71, %v669, 0
    %673 = vmatprep.subr.bf16.mxu0 0
    %674 = vmatpush1.bf16.msra.mxu0 %v124
    %675 = vmatprep.subr.bf16.mxu0 0
    %676 = vmatpush1.bf16.msra.mxu0 %v125
    %677 = vmatprep.subr.bf16.mxu0 0
    %678 = vmatpush1.bf16.msra.mxu0 0
    %679 = vmatprep.subr.bf16.mxu0 0
    %680 = vmatpush1.bf16.msra.mxu0 0
    %681 = vmatprep.subr.bf16.mxu0 0
    %682 = vmatpush1.bf16.msra.mxu0 0
    %683 = vmatprep.subr.bf16.mxu0 0
    %684 = vmatpush1.bf16.msra.mxu0 0
    %685 = vmatprep.subr.bf16.mxu0 0
    %686 = vmatpush1.bf16.msra.mxu0 0
    %687 = vmatprep.subr.bf16.mxu0 0
    %688 = vmatpush1.bf16.msra.mxu0 0
    %689 = vmatprep.subr.bf16.mxu0 0
    %690 = vmatpush1.bf16.msra.mxu0 0
    %691 = vmatprep.subr.bf16.mxu0 0
    %692 = vmatpush1.bf16.msra.mxu0 0
    %693 = vmatprep.subr.bf16.mxu0 0
    %694 = vmatpush1.bf16.msra.mxu0 0
    %695 = vmatprep.subr.bf16.mxu0 0
    %696 = vmatpush1.bf16.msra.mxu0 0
    %697 = vmatprep.subr.bf16.mxu0 0
    %698 = vmatpush1.bf16.msra.mxu0 0
    %699 = vmatprep.subr.bf16.mxu0 0
    %700 = vmatpush1.bf16.msra.mxu0 0
    %701 = vmatprep.subr.bf16.mxu0 0
    %702 = vmatpush1.bf16.msra.mxu0 0
    %703 = vmatprep.subr.bf16.mxu0 0
    %704 = vmatpush1.bf16.msra.mxu0 0
    %705 = vmatprep.mubr.bf16.mxu0 0
    %706 = vmatmul.mubr.bf16.gmra.mrb[0].mxu0 %v671
    %v707 = vpop.f32.mrb[0].mxu0
    %v708 = vadd.f32 0.0, %v707
    %v709 = vpop.f32.mrb[0].mxu0
    %v710 = vpop.f32.mrb[0].mxu0
    %v711 = vpop.f32.mrb[0].mxu0
    %712 = vdwg.mxu0
    %v714 = vrot.slane %v708, 2
    %v716 = vadd.f32 %v113, %v714
    %v717 = vxor.u32 %v716, 2147483648
    %v718 = vmul.f32 %v717, 1.442695
    %v719 = vpow.pop %v718
    %v720 = vadd.f32 %v719, 1.0
    %v721 = vrcp.pop %v720
    %v722 = vmul.f32 1.0, %v721
    %v723 = vtanh.pop %v716
    %v725 = vrot.slane %v658, 6
    %v727 = vmul.f32 %v722, %v725
    %729 = vrot.lane.b32.xlu0 %v723, 64
    %v730 = vpop.permute.xlu0 %729
    %v732 = vmul.f32 %v722, %v730
    %734 = vrot.lane.b32.xlu0 %v732, 32
    %v735 = vpop.permute.xlu0 %734
    %v737 = vadd.f32 %v727, %v735
    %v738 = vtanh.pop %v737
    %740 = vrot.lane.b32.xlu0 %v738, 64
    %v741 = vpop.permute.xlu0 %740
    %v743 = vmul.f32 %v722, %v741
    %vm744 = vcmask 1041408
    %v745 = vsel %vm744, %v195, %v273
    %vm746 = vcmask 1043456
    %v747 = vsel %vm746, %v745, %v352
    %vm748 = vcmask 1045504
    %v749 = vsel %vm748, %v747, %v431
    %v750 = vsel %vm744, %v507, %v585
    %v751 = vsel %vm746, %v750, %v664
    %v752 = vsel %vm748, %v751, %v743
    %v753 = vpack.c.bf16 %v752, %v749
    %v754 = vlaneseq
    %v755 = vshrl.u32 %v754, 7
    %v756 = vsub.s32 1, %v755
    %v757 = vrot.slane %v25, %v756
    %759 = vrot.lane.b32.xlu0 %v753, 32
    %v760 = vpop.permute.xlu0 %759
    %v765 = vunpack.c.l.b16 %v39
    %v766 = vunpack.c.l.b16 %v40
    %v767 = vunpack.c.l.b16 %v41
    %v768 = vunpack.c.l.b16 %v42
    %v769 = vpack.c.b16 %v766, %v765
    %v770 = vpack.c.b16 %v768, %v767
    %v774 = vsel %vm71, %v760, 0
    %776 = vmatprep.subr.bf16.mxu0 0
    %777 = vmatpush1.bf16.msra.mxu0 %v769
    %778 = vmatprep.subr.bf16.mxu0 0
    %779 = vmatpush1.bf16.msra.mxu0 %v770
    %780 = vmatprep.subr.bf16.mxu0 0
    %781 = vmatpush1.bf16.msra.mxu0 0
    %782 = vmatprep.subr.bf16.mxu0 0
    %783 = vmatpush1.bf16.msra.mxu0 0
    %784 = vmatprep.subr.bf16.mxu0 0
    %785 = vmatpush1.bf16.msra.mxu0 0
    %786 = vmatprep.subr.bf16.mxu0 0
    %787 = vmatpush1.bf16.msra.mxu0 0
    %788 = vmatprep.subr.bf16.mxu0 0
    %789 = vmatpush1.bf16.msra.mxu0 0
    %790 = vmatprep.subr.bf16.mxu0 0
    %791 = vmatpush1.bf16.msra.mxu0 0
    %792 = vmatprep.subr.bf16.mxu0 0
    %793 = vmatpush1.bf16.msra.mxu0 0
    %794 = vmatprep.subr.bf16.mxu0 0
    %795 = vmatpush1.bf16.msra.mxu0 0
    %796 = vmatprep.subr.bf16.mxu0 0
    %797 = vmatpush1.bf16.msra.mxu0 0
    %798 = vmatprep.subr.bf16.mxu0 0
    %799 = vmatpush1.bf16.msra.mxu0 0
    %800 = vmatprep.subr.bf16.mxu0 0
    %801 = vmatpush1.bf16.msra.mxu0 0
    %802 = vmatprep.subr.bf16.mxu0 0
    %803 = vmatpush1.bf16.msra.mxu0 0
    %804 = vmatprep.subr.bf16.mxu0 0
    %805 = vmatpush1.bf16.msra.mxu0 0
    %806 = vmatprep.subr.bf16.mxu0 0
    %807 = vmatpush1.bf16.msra.mxu0 0
    %808 = vmatprep.mubr.bf16.mxu0 0
    %809 = vmatmul.mubr.bf16.gmra.mrb[0].mxu0 %v774
    %v810 = vpop.f32.mrb[0].mxu0
    %v811 = vadd.f32 %v757, %v810
    %v812 = vpop.f32.mrb[0].mxu0
    %v813 = vpop.f32.mrb[0].mxu0
    %v814 = vadd.f32 %v757, %v813
    %v815 = vpop.f32.mrb[0].mxu0
    %816 = vdwg.mxu0
    %v821 = vunpack.c.l.b16 %v44
    %v822 = vunpack.c.l.b16 %v45
    %v823 = vunpack.c.l.b16 %v46
    %v824 = vunpack.c.l.b16 %v47
    %v825 = vpack.c.b16 %v822, %v821
    %v826 = vpack.c.b16 %v824, %v823
    %829 = vmatprep.subr.bf16.mxu0 0
    %830 = vmatpush1.bf16.msra.mxu0 %v825
    %831 = vmatprep.subr.bf16.mxu0 0
    %832 = vmatpush1.bf16.msra.mxu0 %v826
    %833 = vmatprep.subr.bf16.mxu0 0
    %834 = vmatpush1.bf16.msra.mxu0 0
    %835 = vmatprep.subr.bf16.mxu0 0
    %836 = vmatpush1.bf16.msra.mxu0 0
    %837 = vmatprep.subr.bf16.mxu0 0
    %838 = vmatpush1.bf16.msra.mxu0 0
    %839 = vmatprep.subr.bf16.mxu0 0
    %840 = vmatpush1.bf16.msra.mxu0 0
    %841 = vmatprep.subr.bf16.mxu0 0
    %842 = vmatpush1.bf16.msra.mxu0 0
    %843 = vmatprep.subr.bf16.mxu0 0
    %844 = vmatpush1.bf16.msra.mxu0 0
    %845 = vmatprep.subr.bf16.mxu0 0
    %846 = vmatpush1.bf16.msra.mxu0 0
    %847 = vmatprep.subr.bf16.mxu0 0
    %848 = vmatpush1.bf16.msra.mxu0 0
    %849 = vmatprep.subr.bf16.mxu0 0
    %850 = vmatpush1.bf16.msra.mxu0 0
    %851 = vmatprep.subr.bf16.mxu0 0
    %852 = vmatpush1.bf16.msra.mxu0 0
    %853 = vmatprep.subr.bf16.mxu0 0
    %854 = vmatpush1.bf16.msra.mxu0 0
    %855 = vmatprep.subr.bf16.mxu0 0
    %856 = vmatpush1.bf16.msra.mxu0 0
    %857 = vmatprep.subr.bf16.mxu0 0
    %858 = vmatpush1.bf16.msra.mxu0 0
    %859 = vmatprep.subr.bf16.mxu0 0
    %860 = vmatpush1.bf16.msra.mxu0 0
    %861 = vmatprep.mubr.bf16.mxu0 0
    %862 = vmatmul.mubr.bf16.gmra.mrb[0].mxu0 %v129
    %v863 = vpop.f32.mrb[0].mxu0
    %v864 = vadd.f32 0.0, %v863
    %v865 = vpop.f32.mrb[0].mxu0
    %v866 = vpop.f32.mrb[0].mxu0
    %v867 = vpop.f32.mrb[0].mxu0
    %868 = vdwg.mxu0
    %v869 = vadd.f32 %v811, %v864
    %v870 = vxor.u32 %v869, 2147483648
    %v871 = vmul.f32 %v870, 1.442695
    %v872 = vpow.pop %v871
    %v873 = vadd.f32 %v872, 1.0
    %v874 = vrcp.pop %v873
    %v875 = vmul.f32 1.0, %v874
    %v876 = vtanh.pop %v869
    %v877 = vmul.f32 %v875, 0.0
    %879 = vrot.lane.b32.xlu0 %v876, 64
    %v880 = vpop.permute.xlu0 %879
    %v882 = vmul.f32 %v875, %v880
    %884 = vrot.lane.b32.xlu0 %v882, 32
    %v885 = vpop.permute.xlu0 %884
    %v887 = vadd.f32 %v877, %v885
    %v888 = vtanh.pop %v887
    %890 = vrot.lane.b32.xlu0 %v888, 64
    %v891 = vpop.permute.xlu0 %890
    %v893 = vmul.f32 %v875, %v891
    %v894 = vpack.c.bf16 %v893, %v893
    %896 = vrot.lane.b32.xlu0 %v894, 32
    %v897 = vpop.permute.xlu0 %896
    %v899 = vsel %vm71, %v897, 0
    %901 = vmatprep.subr.bf16.mxu0 0
    %902 = vmatpush1.bf16.msra.mxu0 %v825
    %903 = vmatprep.subr.bf16.mxu0 0
    %904 = vmatpush1.bf16.msra.mxu0 %v826
    %905 = vmatprep.subr.bf16.mxu0 0
    %906 = vmatpush1.bf16.msra.mxu0 0
    %907 = vmatprep.subr.bf16.mxu0 0
    %908 = vmatpush1.bf16.msra.mxu0 0
    %909 = vmatprep.subr.bf16.mxu0 0
    %910 = vmatpush1.bf16.msra.mxu0 0
    %911 = vmatprep.subr.bf16.mxu0 0
    %912 = vmatpush1.bf16.msra.mxu0 0
    %913 = vmatprep.subr.bf16.mxu0 0
    %914 = vmatpush1.bf16.msra.mxu0 0
    %915 = vmatprep.subr.bf16.mxu0 0
    %916 = vmatpush1.bf16.msra.mxu0 0
    %917 = vmatprep.subr.bf16.mxu0 0
    %918 = vmatpush1.bf16.msra.mxu0 0
    %919 = vmatprep.subr.bf16.mxu0 0
    %920 = vmatpush1.bf16.msra.mxu0 0
    %921 = vmatprep.subr.bf16.mxu0 0
    %922 = vmatpush1.bf16.msra.mxu0 0
    %923 = vmatprep.subr.bf16.mxu0 0
    %924 = vmatpush1.bf16.msra.mxu0 0
    %925 = vmatprep.subr.bf16.mxu0 0
    %926 = vmatpush1.bf16.msra.mxu0 0
    %927 = vmatprep.subr.bf16.mxu0 0
    %928 = vmatpush1.bf16.msra.mxu0 0
    %929 = vmatprep.subr.bf16.mxu0 0
    %930 = vmatpush1.bf16.msra.mxu0 0
    %931 = vmatprep.subr.bf16.mxu0 0
    %932 = vmatpush1.bf16.msra.mxu0 0
    %933 = vmatprep.mubr.bf16.mxu0 0
    %934 = vmatmul.mubr.bf16.gmra.mrb[0].mxu0 %v899
    %v935 = vpop.f32.mrb[0].mxu0
    %v936 = vadd.f32 0.0, %v935
    %v937 = vpop.f32.mrb[0].mxu0
    %v938 = vpop.f32.mrb[0].mxu0
    %v939 = vpop.f32.mrb[0].mxu0
    %940 = vdwg.mxu0
    %v942 = vrot.slane %v936, 6
    %v944 = vadd.f32 %v811, %v942
    %v945 = vxor.u32 %v944, 2147483648
    %v946 = vmul.f32 %v945, 1.442695
    %v947 = vpow.pop %v946
    %v948 = vadd.f32 %v947, 1.0
    %v949 = vrcp.pop %v948
    %v950 = vmul.f32 1.0, %v949
    %v951 = vtanh.pop %v944
    %v953 = vrot.slane %v887, 6
    %v955 = vmul.f32 %v950, %v953
    %957 = vrot.lane.b32.xlu0 %v951, 64
    %v958 = vpop.permute.xlu0 %957
    %v960 = vmul.f32 %v950, %v958
    %962 = vrot.lane.b32.xlu0 %v960, 32
    %v963 = vpop.permute.xlu0 %962
    %v965 = vadd.f32 %v955, %v963
    %v966 = vtanh.pop %v965
    %968 = vrot.lane.b32.xlu0 %v966, 64
    %v969 = vpop.permute.xlu0 %968
    %v971 = vmul.f32 %v950, %v969
    %v972 = vpack.c.bf16 %v971, %v971
    %v974 = vrot.slane %v972, 1
    %975 = vrot.lane.b32.xlu0 %v974, 32
    %v976 = vpop.permute.xlu0 %975
    %v978 = vsel %vm71, %v976, 0
    %980 = vmatprep.subr.bf16.mxu0 0
    %981 = vmatpush1.bf16.msra.mxu0 %v825
    %982 = vmatprep.subr.bf16.mxu0 0
    %983 = vmatpush1.bf16.msra.mxu0 %v826
    %984 = vmatprep.subr.bf16.mxu0 0
    %985 = vmatpush1.bf16.msra.mxu0 0
    %986 = vmatprep.subr.bf16.mxu0 0
    %987 = vmatpush1.bf16.msra.mxu0 0
    %988 = vmatprep.subr.bf16.mxu0 0
    %989 = vmatpush1.bf16.msra.mxu0 0
    %990 = vmatprep.subr.bf16.mxu0 0
    %991 = vmatpush1.bf16.msra.mxu0 0
    %992 = vmatprep.subr.bf16.mxu0 0
    %993 = vmatpush1.bf16.msra.mxu0 0
    %994 = vmatprep.subr.bf16.mxu0 0
    %995 = vmatpush1.bf16.msra.mxu0 0
    %996 = vmatprep.subr.bf16.mxu0 0
    %997 = vmatpush1.bf16.msra.mxu0 0
    %998 = vmatprep.subr.bf16.mxu0 0
    %999 = vmatpush1.bf16.msra.mxu0 0
    %1000 = vmatprep.subr.bf16.mxu0 0
    %1001 = vmatpush1.bf16.msra.mxu0 0
    %1002 = vmatprep.subr.bf16.mxu0 0
    %1003 = vmatpush1.bf16.msra.mxu0 0
    %1004 = vmatprep.subr.bf16.mxu0 0
    %1005 = vmatpush1.bf16.msra.mxu0 0
    %1006 = vmatprep.subr.bf16.mxu0 0
    %1007 = vmatpush1.bf16.msra.mxu0 0
    %1008 = vmatprep.subr.bf16.mxu0 0
    %1009 = vmatpush1.bf16.msra.mxu0 0
    %1010 = vmatprep.subr.bf16.mxu0 0
    %1011 = vmatpush1.bf16.msra.mxu0 0
    %1012 = vmatprep.mubr.bf16.mxu0 0
    %1013 = vmatmul.mubr.bf16.gmra.mrb[0].mxu0 %v978
    %v1014 = vpop.f32.mrb[0].mxu0
    %v1015 = vadd.f32 0.0, %v1014
    %v1016 = vpop.f32.mrb[0].mxu0
    %v1017 = vpop.f32.mrb[0].mxu0
    %v1018 = vpop.f32.mrb[0].mxu0
    %1019 = vdwg.mxu0
    %v1021 = vrot.slane %v1015, 4
    %v1023 = vadd.f32 %v811, %v1021
    %v1024 = vxor.u32 %v1023, 2147483648
    %v1025 = vmul.f32 %v1024, 1.442695
    %v1026 = vpow.pop %v1025
    %v1027 = vadd.f32 %v1026, 1.0
    %v1028 = vrcp.pop %v1027
    %v1029 = vmul.f32 1.0, %v1028
    %v1030 = vtanh.pop %v1023
    %v1032 = vrot.slane %v965, 6
    %v1034 = vmul.f32 %v1029, %v1032
    %1036 = vrot.lane.b32.xlu0 %v1030, 64
    %v1037 = vpop.permute.xlu0 %1036
    %v1039 = vmul.f32 %v1029, %v1037
    %1041 = vrot.lane.b32.xlu0 %v1039, 32
    %v1042 = vpop.permute.xlu0 %1041
    %v1044 = vadd.f32 %v1034, %v1042
    %v1045 = vtanh.pop %v1044
    %1047 = vrot.lane.b32.xlu0 %v1045, 64
    %v1048 = vpop.permute.xlu0 %1047
    %v1050 = vmul.f32 %v1029, %v1048
    %v1051 = vpack.c.bf16 %v1050, %v1050
    %v1053 = vrot.slane %v1051, 2
    %1054 = vrot.lane.b32.xlu0 %v1053, 32
    %v1055 = vpop.permute.xlu0 %1054
    %v1057 = vsel %vm71, %v1055, 0
    %1059 = vmatprep.subr.bf16.mxu0 0
    %1060 = vmatpush1.bf16.msra.mxu0 %v825
    %1061 = vmatprep.subr.bf16.mxu0 0
    %1062 = vmatpush1.bf16.msra.mxu0 %v826
    %1063 = vmatprep.subr.bf16.mxu0 0
    %1064 = vmatpush1.bf16.msra.mxu0 0
    %1065 = vmatprep.subr.bf16.mxu0 0
    %1066 = vmatpush1.bf16.msra.mxu0 0
    %1067 = vmatprep.subr.bf16.mxu0 0
    %1068 = vmatpush1.bf16.msra.mxu0 0
    %1069 = vmatprep.subr.bf16.mxu0 0
    %1070 = vmatpush1.bf16.msra.mxu0 0
    %1071 = vmatprep.subr.bf16.mxu0 0
    %1072 = vmatpush1.bf16.msra.mxu0 0
    %1073 = vmatprep.subr.bf16.mxu0 0
    %1074 = vmatpush1.bf16.msra.mxu0 0
    %1075 = vmatprep.subr.bf16.mxu0 0
    %1076 = vmatpush1.bf16.msra.mxu0 0
    %1077 = vmatprep.subr.bf16.mxu0 0
    %1078 = vmatpush1.bf16.msra.mxu0 0
    %1079 = vmatprep.subr.bf16.mxu0 0
    %1080 = vmatpush1.bf16.msra.mxu0 0
    %1081 = vmatprep.subr.bf16.mxu0 0
    %1082 = vmatpush1.bf16.msra.mxu0 0
    %1083 = vmatprep.subr.bf16.mxu0 0
    %1084 = vmatpush1.bf16.msra.mxu0 0
    %1085 = vmatprep.subr.bf16.mxu0 0
    %1086 = vmatpush1.bf16.msra.mxu0 0
    %1087 = vmatprep.subr.bf16.mxu0 0
    %1088 = vmatpush1.bf16.msra.mxu0 0
    %1089 = vmatprep.subr.bf16.mxu0 0
    %1090 = vmatpush1.bf16.msra.mxu0 0
    %1091 = vmatprep.mubr.bf16.mxu0 0
    %1092 = vmatmul.mubr.bf16.gmra.mrb[0].mxu0 %v1057
    %v1093 = vpop.f32.mrb[0].mxu0
    %v1094 = vadd.f32 0.0, %v1093
    %v1095 = vpop.f32.mrb[0].mxu0
    %v1096 = vpop.f32.mrb[0].mxu0
    %v1097 = vpop.f32.mrb[0].mxu0
    %1098 = vdwg.mxu0
    %v1100 = vrot.slane %v1094, 2
    %v1102 = vadd.f32 %v811, %v1100
    %v1103 = vxor.u32 %v1102, 2147483648
    %v1104 = vmul.f32 %v1103, 1.442695
    %v1105 = vpow.pop %v1104
    %v1106 = vadd.f32 %v1105, 1.0
    %v1107 = vrcp.pop %v1106
    %v1108 = vmul.f32 1.0, %v1107
    %v1109 = vtanh.pop %v1102
    %v1111 = vrot.slane %v1044, 6
    %v1113 = vmul.f32 %v1108, %v1111
    %1115 = vrot.lane.b32.xlu0 %v1109, 64
    %v1116 = vpop.permute.xlu0 %1115
    %v1118 = vmul.f32 %v1108, %v1116
    %1120 = vrot.lane.b32.xlu0 %v1118, 32
    %v1121 = vpop.permute.xlu0 %1120
    %v1123 = vadd.f32 %v1113, %v1121
    %v1124 = vtanh.pop %v1123
    %1126 = vrot.lane.b32.xlu0 %v1124, 64
    %v1127 = vpop.permute.xlu0 %1126
    %v1129 = vmul.f32 %v1108, %v1127
    %v1130 = vpack.c.bf16 %v1129, %v1129
    %v1132 = vrot.slane %v1130, 3
    %1133 = vrot.lane.b32.xlu0 %v1132, 32
    %v1134 = vpop.permute.xlu0 %1133
    %v1136 = vsel %vm71, %v1134, 0
    %1138 = vmatprep.subr.bf16.mxu0 0
    %1139 = vmatpush1.bf16.msra.mxu0 %v825
    %1140 = vmatprep.subr.bf16.mxu0 0
    %1141 = vmatpush1.bf16.msra.mxu0 %v826
    %1142 = vmatprep.subr.bf16.mxu0 0
    %1143 = vmatpush1.bf16.msra.mxu0 0
    %1144 = vmatprep.subr.bf16.mxu0 0
    %1145 = vmatpush1.bf16.msra.mxu0 0
    %1146 = vmatprep.subr.bf16.mxu0 0
    %1147 = vmatpush1.bf16.msra.mxu0 0
    %1148 = vmatprep.subr.bf16.mxu0 0
    %1149 = vmatpush1.bf16.msra.mxu0 0
    %1150 = vmatprep.subr.bf16.mxu0 0
    %1151 = vmatpush1.bf16.msra.mxu0 0
    %1152 = vmatprep.subr.bf16.mxu0 0
    %1153 = vmatpush1.bf16.msra.mxu0 0
    %1154 = vmatprep.subr.bf16.mxu0 0
    %1155 = vmatpush1.bf16.msra.mxu0 0
    %1156 = vmatprep.subr.bf16.mxu0 0
    %1157 = vmatpush1.bf16.msra.mxu0 0
    %1158 = vmatprep.subr.bf16.mxu0 0
    %1159 = vmatpush1.bf16.msra.mxu0 0
    %1160 = vmatprep.subr.bf16.mxu0 0
    %1161 = vmatpush1.bf16.msra.mxu0 0
    %1162 = vmatprep.subr.bf16.mxu0 0
    %1163 = vmatpush1.bf16.msra.mxu0 0
    %1164 = vmatprep.subr.bf16.mxu0 0
    %1165 = vmatpush1.bf16.msra.mxu0 0
    %1166 = vmatprep.subr.bf16.mxu0 0
    %1167 = vmatpush1.bf16.msra.mxu0 0
    %1168 = vmatprep.subr.bf16.mxu0 0
    %1169 = vmatpush1.bf16.msra.mxu0 0
    %1170 = vmatprep.mubr.bf16.mxu0 0
    %1171 = vmatmul.mubr.bf16.gmra.mrb[0].mxu0 %v1136
    %v1172 = vpop.f32.mrb[0].mxu0
    %v1173 = vadd.f32 0.0, %v1172
    %v1174 = vpop.f32.mrb[0].mxu0
    %v1175 = vpop.f32.mrb[0].mxu0
    %v1176 = vpop.f32.mrb[0].mxu0
    %1177 = vdwg.mxu0
    %v1178 = vadd.f32 %v814, %v1173
    %v1179 = vxor.u32 %v1178, 2147483648
    %v1180 = vmul.f32 %v1179, 1.442695
    %v1181 = vpow.pop %v1180
    %v1182 = vadd.f32 %v1181, 1.0
    %v1183 = vrcp.pop %v1182
    %v1184 = vmul.f32 1.0, %v1183
    %v1185 = vtanh.pop %v1178
    %v1187 = vrot.slane %v1123, 6
    %v1189 = vmul.f32 %v1184, %v1187
    %1191 = vrot.lane.b32.xlu0 %v1185, 64
    %v1192 = vpop.permute.xlu0 %1191
    %v1194 = vmul.f32 %v1184, %v1192
    %1196 = vrot.lane.b32.xlu0 %v1194, 32
    %v1197 = vpop.permute.xlu0 %1196
    %v1199 = vadd.f32 %v1189, %v1197
    %v1200 = vtanh.pop %v1199
    %1202 = vrot.lane.b32.xlu0 %v1200, 64
    %v1203 = vpop.permute.xlu0 %1202
    %v1205 = vmul.f32 %v1184, %v1203
    %v1206 = vpack.c.bf16 %v1205, %v1205
    %1208 = vrot.lane.b32.xlu0 %v1206, 32
    %v1209 = vpop.permute.xlu0 %1208
    %v1211 = vsel %vm71, %v1209, 0
    %1213 = vmatprep.subr.bf16.mxu0 0
    %1214 = vmatpush1.bf16.msra.mxu0 %v825
    %1215 = vmatprep.subr.bf16.mxu0 0
    %1216 = vmatpush1.bf16.msra.mxu0 %v826
    %1217 = vmatprep.subr.bf16.mxu0 0
    %1218 = vmatpush1.bf16.msra.mxu0 0
    %1219 = vmatprep.subr.bf16.mxu0 0
    %1220 = vmatpush1.bf16.msra.mxu0 0
    %1221 = vmatprep.subr.bf16.mxu0 0
    %1222 = vmatpush1.bf16.msra.mxu0 0
    %1223 = vmatprep.subr.bf16.mxu0 0
    %1224 = vmatpush1.bf16.msra.mxu0 0
    %1225 = vmatprep.subr.bf16.mxu0 0
    %1226 = vmatpush1.bf16.msra.mxu0 0
    %1227 = vmatprep.subr.bf16.mxu0 0
    %1228 = vmatpush1.bf16.msra.mxu0 0
    %1229 = vmatprep.subr.bf16.mxu0 0
    %1230 = vmatpush1.bf16.msra.mxu0 0
    %1231 = vmatprep.subr.bf16.mxu0 0
    %1232 = vmatpush1.bf16.msra.mxu0 0
    %1233 = vmatprep.subr.bf16.mxu0 0
    %1234 = vmatpush1.bf16.msra.mxu0 0
    %1235 = vmatprep.subr.bf16.mxu0 0
    %1236 = vmatpush1.bf16.msra.mxu0 0
    %1237 = vmatprep.subr.bf16.mxu0 0
    %1238 = vmatpush1.bf16.msra.mxu0 0
    %1239 = vmatprep.subr.bf16.mxu0 0
    %1240 = vmatpush1.bf16.msra.mxu0 0
    %1241 = vmatprep.subr.bf16.mxu0 0
    %1242 = vmatpush1.bf16.msra.mxu0 0
    %1243 = vmatprep.subr.bf16.mxu0 0
    %1244 = vmatpush1.bf16.msra.mxu0 0
    %1245 = vmatprep.mubr.bf16.mxu0 0
    %1246 = vmatmul.mubr.bf16.gmra.mrb[0].mxu0 %v1211
    %v1247 = vpop.f32.mrb[0].mxu0
    %v1248 = vadd.f32 0.0, %v1247
    %v1249 = vpop.f32.mrb[0].mxu0
    %v1250 = vpop.f32.mrb[0].mxu0
    %v1251 = vpop.f32.mrb[0].mxu0
    %1252 = vdwg.mxu0
    %v1254 = vrot.slane %v1248, 6
    %v1256 = vadd.f32 %v814, %v1254
    %v1257 = vxor.u32 %v1256, 2147483648
    %v1258 = vmul.f32 %v1257, 1.442695
    %v1259 = vpow.pop %v1258
    %v1260 = vadd.f32 %v1259, 1.0
    %v1261 = vrcp.pop %v1260
    %v1262 = vmul.f32 1.0, %v1261
    %v1263 = vtanh.pop %v1256
    %v1265 = vrot.slane %v1199, 6
    %v1267 = vmul.f32 %v1262, %v1265
    %1269 = vrot.lane.b32.xlu0 %v1263, 64
    %v1270 = vpop.permute.xlu0 %1269
    %v1272 = vmul.f32 %v1262, %v1270
    %1274 = vrot.lane.b32.xlu0 %v1272, 32
    %v1275 = vpop.permute.xlu0 %1274
    %v1277 = vadd.f32 %v1267, %v1275
    %v1278 = vtanh.pop %v1277
    %1280 = vrot.lane.b32.xlu0 %v1278, 64
    %v1281 = vpop.permute.xlu0 %1280
    %v1283 = vmul.f32 %v1262, %v1281
    %v1284 = vpack.c.bf16 %v1283, %v1283
    %v1286 = vrot.slane %v1284, 1
    %1287 = vrot.lane.b32.xlu0 %v1286, 32
    %v1288 = vpop.permute.xlu0 %1287
    %v1290 = vsel %vm71, %v1288, 0
    %1292 = vmatprep.subr.bf16.mxu0 0
    %1293 = vmatpush1.bf16.msra.mxu0 %v825
    %1294 = vmatprep.subr.bf16.mxu0 0
    %1295 = vmatpush1.bf16.msra.mxu0 %v826
    %1296 = vmatprep.subr.bf16.mxu0 0
    %1297 = vmatpush1.bf16.msra.mxu0 0
    %1298 = vmatprep.subr.bf16.mxu0 0
    %1299 = vmatpush1.bf16.msra.mxu0 0
    %1300 = vmatprep.subr.bf16.mxu0 0
    %1301 = vmatpush1.bf16.msra.mxu0 0
    %1302 = vmatprep.subr.bf16.mxu0 0
    %1303 = vmatpush1.bf16.msra.mxu0 0
    %1304 = vmatprep.subr.bf16.mxu0 0
    %1305 = vmatpush1.bf16.msra.mxu0 0
    %1306 = vmatprep.subr.bf16.mxu0 0
    %1307 = vmatpush1.bf16.msra.mxu0 0
    %1308 = vmatprep.subr.bf16.mxu0 0
    %1309 = vmatpush1.bf16.msra.mxu0 0
    %1310 = vmatprep.subr.bf16.mxu0 0
    %1311 = vmatpush1.bf16.msra.mxu0 0
    %1312 = vmatprep.subr.bf16.mxu0 0
    %1313 = vmatpush1.bf16.msra.mxu0 0
    %1314 = vmatprep.subr.bf16.mxu0 0
    %1315 = vmatpush1.bf16.msra.mxu0 0
    %1316 = vmatprep.subr.bf16.mxu0 0
    %1317 = vmatpush1.bf16.msra.mxu0 0
    %1318 = vmatprep.subr.bf16.mxu0 0
    %1319 = vmatpush1.bf16.msra.mxu0 0
    %1320 = vmatprep.subr.bf16.mxu0 0
    %1321 = vmatpush1.bf16.msra.mxu0 0
    %1322 = vmatprep.subr.bf16.mxu0 0
    %1323 = vmatpush1.bf16.msra.mxu0 0
    %1324 = vmatprep.mubr.bf16.mxu0 0
    %1325 = vmatmul.mubr.bf16.gmra.mrb[0].mxu0 %v1290
    %v1326 = vpop.f32.mrb[0].mxu0
    %v1327 = vadd.f32 0.0, %v1326
    %v1328 = vpop.f32.mrb[0].mxu0
    %v1329 = vpop.f32.mrb[0].mxu0
    %v1330 = vpop.f32.mrb[0].mxu0
    %1331 = vdwg.mxu0
    %v1333 = vrot.slane %v1327, 4
    %v1335 = vadd.f32 %v814, %v1333
    %v1336 = vxor.u32 %v1335, 2147483648
    %v1337 = vmul.f32 %v1336, 1.442695
    %v1338 = vpow.pop %v1337
    %v1339 = vadd.f32 %v1338, 1.0
    %v1340 = vrcp.pop %v1339
    %v1341 = vmul.f32 1.0, %v1340
    %v1342 = vtanh.pop %v1335
    %v1344 = vrot.slane %v1277, 6
    %v1346 = vmul.f32 %v1341, %v1344
    %1348 = vrot.lane.b32.xlu0 %v1342, 64
    %v1349 = vpop.permute.xlu0 %1348
    %v1351 = vmul.f32 %v1341, %v1349
    %1353 = vrot.lane.b32.xlu0 %v1351, 32
    %v1354 = vpop.permute.xlu0 %1353
    %v1356 = vadd.f32 %v1346, %v1354
    %v1357 = vtanh.pop %v1356
    %1359 = vrot.lane.b32.xlu0 %v1357, 64
    %v1360 = vpop.permute.xlu0 %1359
    %v1362 = vmul.f32 %v1341, %v1360
    %v1363 = vpack.c.bf16 %v1362, %v1362
    %v1365 = vrot.slane %v1363, 2
    %1366 = vrot.lane.b32.xlu0 %v1365, 32
    %v1367 = vpop.permute.xlu0 %1366
    %v1369 = vsel %vm71, %v1367, 0
    %1371 = vmatprep.subr.bf16.mxu0 0
    %1372 = vmatpush1.bf16.msra.mxu0 %v825
    %1373 = vmatprep.subr.bf16.mxu0 0
    %1374 = vmatpush1.bf16.msra.mxu0 %v826
    %1375 = vmatprep.subr.bf16.mxu0 0
    %1376 = vmatpush1.bf16.msra.mxu0 0
    %1377 = vmatprep.subr.bf16.mxu0 0
    %1378 = vmatpush1.bf16.msra.mxu0 0
    %1379 = vmatprep.subr.bf16.mxu0 0
    %1380 = vmatpush1.bf16.msra.mxu0 0
    %1381 = vmatprep.subr.bf16.mxu0 0
    %1382 = vmatpush1.bf16.msra.mxu0 0
    %1383 = vmatprep.subr.bf16.mxu0 0
    %1384 = vmatpush1.bf16.msra.mxu0 0
    %1385 = vmatprep.subr.bf16.mxu0 0
    %1386 = vmatpush1.bf16.msra.mxu0 0
    %1387 = vmatprep.subr.bf16.mxu0 0
    %1388 = vmatpush1.bf16.msra.mxu0 0
    %1389 = vmatprep.subr.bf16.mxu0 0
    %1390 = vmatpush1.bf16.msra.mxu0 0
    %1391 = vmatprep.subr.bf16.mxu0 0
    %1392 = vmatpush1.bf16.msra.mxu0 0
    %1393 = vmatprep.subr.bf16.mxu0 0
    %1394 = vmatpush1.bf16.msra.mxu0 0
    %1395 = vmatprep.subr.bf16.mxu0 0
    %1396 = vmatpush1.bf16.msra.mxu0 0
    %1397 = vmatprep.subr.bf16.mxu0 0
    %1398 = vmatpush1.bf16.msra.mxu0 0
    %1399 = vmatprep.subr.bf16.mxu0 0
    %1400 = vmatpush1.bf16.msra.mxu0 0
    %1401 = vmatprep.subr.bf16.mxu0 0
    %1402 = vmatpush1.bf16.msra.mxu0 0
    %1403 = vmatprep.mubr.bf16.mxu0 0
    %1404 = vmatmul.mubr.bf16.gmra.mrb[0].mxu0 %v1369
    %v1405 = vpop.f32.mrb[0].mxu0
    %v1406 = vadd.f32 0.0, %v1405
    %v1407 = vpop.f32.mrb[0].mxu0
    %v1408 = vpop.f32.mrb[0].mxu0
    %v1409 = vpop.f32.mrb[0].mxu0
    %1410 = vdwg.mxu0
    %v1412 = vrot.slane %v1406, 2
    %v1414 = vadd.f32 %v814, %v1412
    %v1415 = vxor.u32 %v1414, 2147483648
    %v1416 = vmul.f32 %v1415, 1.442695
    %v1417 = vpow.pop %v1416
    %v1418 = vadd.f32 %v1417, 1.0
    %v1419 = vrcp.pop %v1418
    %v1420 = vmul.f32 1.0, %v1419
    %v1421 = vtanh.pop %v1414
    %v1423 = vrot.slane %v1356, 6
    %v1425 = vmul.f32 %v1420, %v1423
    %1427 = vrot.lane.b32.xlu0 %v1421, 64
    %v1428 = vpop.permute.xlu0 %1427
    %v1430 = vmul.f32 %v1420, %v1428
    %1432 = vrot.lane.b32.xlu0 %v1430, 32
    %v1433 = vpop.permute.xlu0 %1432
    %v1435 = vadd.f32 %v1425, %v1433
    %v1436 = vtanh.pop %v1435
    %1438 = vrot.lane.b32.xlu0 %v1436, 64
    %v1439 = vpop.permute.xlu0 %1438
    %v1441 = vmul.f32 %v1420, %v1439
    %1443 = vrot.lane.b32.xlu0 %v1441, 32
    %v1444 = vpop.permute.xlu0 %1443
    %vm1446 = vcmask 261126
    %v1447 = vsel %vm1446, %v1444, 0.0
    %1448 = vadd.xlane.f32.xlu0 %v1447
    %v1449 = vpop.xlane.xlu0 %1448
    %v1450 = vrcp.pop 32.0
    %v1451 = vmul.f32 %v1449, %v1450
    %v1452 = vsub.f32 %v1441, %v1451
    %v1453 = vmul.f32 %v1452, %v1452
    %1455 = vrot.lane.b32.xlu0 %v1453, 32
    %v1456 = vpop.permute.xlu0 %1455
    %v1458 = vsel %vm1446, %v1456, 0.0
    %1459 = vadd.xlane.f32.xlu0 %v1458
    %v1460 = vpop.xlane.xlu0 %1459
    %v1461 = vmul.f32 %v1460, %v1450
    %v1462 = vadd.f32 %v1461, 1e-05
    %v1463 = vrsqrt.pop %v1462
    %v1464 = vmul.f32 %v1452, %v1463
    %v1465 = vlaneseq
    %v1466 = vshrl.u32 %v1465, 7
    %v1467 = vsub.s32 2, %v1466
    %v1468 = vrot.slane %v25, %v1467
    %1470 = vrot.lane.b32.xlu0 %v1468, 96
    %v1471 = vpop.permute.xlu0 %1470
    %v1473 = vmul.f32 %v1464, %v1471
    %v1474 = vlaneseq
    %v1475 = vshrl.u32 %v1474, 7
    %v1476 = vsub.s32 3, %v1475
    %v1477 = vrot.slane %v25, %v1476
    %1479 = vrot.lane.b32.xlu0 %v1477, 96
    %v1480 = vpop.permute.xlu0 %1479
    %v1482 = vadd.f32 %v1473, %v1480
    %v1483 = vpack.c.bf16 %v1482, %v1482
    %v1484 = vld [vmem:[%s3] sm:$0xff]
    %v1485 = vld [vmem:[%s3 + $0x8] sm:$0xff]
    %v1486 = vld [vmem:[%s3 + $0x10] sm:$0xff]
    %v1487 = vld [vmem:[%s3 + $0x18] sm:$0xff]
    %v1488 = vld [vmem:[%s3 + $0x20] sm:$0xff]
    %v1489 = vld [vmem:[%s3 + $0x28] sm:$0xff]
    %v1490 = vld [vmem:[%s3 + $0x30] sm:$0xff]
    %v1491 = vld [vmem:[%s3 + $0x38] sm:$0xff]
    %v1492 = vlaneseq
    %v1493 = vshrl.u32 %v1492, 7
    %v1494 = vsub.s32 4, %v1493
    %v1495 = vrot.slane %v25, %v1494
    %v1496 = vlaneseq
    %v1497 = vshrl.u32 %v1496, 7
    %v1498 = vsub.s32 4, %v1497
    %v1499 = vrot.slane %v26, %v1498
    %v1500 = vlaneseq
    %v1501 = vshrl.u32 %v1500, 7
    %v1502 = vsub.s32 4, %v1501
    %v1503 = vrot.slane %v27, %v1502
    %v1504 = vlaneseq
    %v1505 = vshrl.u32 %v1504, 7
    %v1506 = vsub.s32 4, %v1505
    %v1507 = vrot.slane %v28, %v1506
    %v1509 = vrot.slane %v1483, 3
    %1510 = vrot.lane.b32.xlu0 %v1509, 32
    %v1511 = vpop.permute.xlu0 %1510
    %v1520 = vunpack.c.l.b16 %v1484
    %v1521 = vunpack.c.h.b16 %v1484
    %v1522 = vunpack.c.l.b16 %v1485
    %v1523 = vunpack.c.h.b16 %v1485
    %v1524 = vunpack.c.l.b16 %v1486
    %v1525 = vunpack.c.h.b16 %v1486
    %v1526 = vunpack.c.l.b16 %v1487
    %v1527 = vunpack.c.h.b16 %v1487
    %v1528 = vunpack.c.l.b16 %v1488
    %v1529 = vunpack.c.h.b16 %v1488
    %v1530 = vunpack.c.l.b16 %v1489
    %v1531 = vunpack.c.h.b16 %v1489
    %v1532 = vunpack.c.l.b16 %v1490
    %v1533 = vunpack.c.h.b16 %v1490
    %v1534 = vunpack.c.l.b16 %v1491
    %v1535 = vunpack.c.h.b16 %v1491
    %v1536 = vpack.c.b16 %v1524, %v1520
    %v1537 = vpack.c.b16 %v1525, %v1521
    %v1538 = vpack.c.b16 %v1526, %v1522
    %v1539 = vpack.c.b16 %v1527, %v1523
    %v1540 = vpack.c.b16 %v1532, %v1528
    %v1541 = vpack.c.b16 %v1533, %v1529
    %v1542 = vpack.c.b16 %v1534, %v1530
    %v1543 = vpack.c.b16 %v1535, %v1531
    %v1553 = vsel %vm71, %v1511, 0
    %1555 = vmatprep.subr.bf16.mxu0 %v1537
    %1556 = vmatpush1.bf16.msra.mxu0 %v1536
    %1557 = vmatprep.subr.bf16.mxu0 %v1541
    %1558 = vmatpush1.bf16.msra.mxu0 %v1540
    %1559 = vmatprep.subr.bf16.mxu0 0
    %1560 = vmatpush1.bf16.msra.mxu0 0
    %1561 = vmatprep.subr.bf16.mxu0 0
    %1562 = vmatpush1.bf16.msra.mxu0 0
    %1563 = vmatprep.subr.bf16.mxu0 0
    %1564 = vmatpush1.bf16.msra.mxu0 0
    %1565 = vmatprep.subr.bf16.mxu0 0
    %1566 = vmatpush1.bf16.msra.mxu0 0
    %1567 = vmatprep.subr.bf16.mxu0 0
    %1568 = vmatpush1.bf16.msra.mxu0 0
    %1569 = vmatprep.subr.bf16.mxu0 0
    %1570 = vmatpush1.bf16.msra.mxu0 0
    %1571 = vmatprep.subr.bf16.mxu0 0
    %1572 = vmatpush1.bf16.msra.mxu0 0
    %1573 = vmatprep.subr.bf16.mxu0 0
    %1574 = vmatpush1.bf16.msra.mxu0 0
    %1575 = vmatprep.subr.bf16.mxu0 0
    %1576 = vmatpush1.bf16.msra.mxu0 0
    %1577 = vmatprep.subr.bf16.mxu0 0
    %1578 = vmatpush1.bf16.msra.mxu0 0
    %1579 = vmatprep.subr.bf16.mxu0 0
    %1580 = vmatpush1.bf16.msra.mxu0 0
    %1581 = vmatprep.subr.bf16.mxu0 0
    %1582 = vmatpush1.bf16.msra.mxu0 0
    %1583 = vmatprep.subr.bf16.mxu0 0
    %1584 = vmatpush1.bf16.msra.mxu0 0
    %1585 = vmatprep.subr.bf16.mxu0 0
    %1586 = vmatpush1.bf16.msra.mxu0 0
    %1587 = vmatprep.mubr.bf16.mxu0 0
    %1588 = vmatmul.mubr.bf16.gmra.mrb[0].mxu0 %v1553
    %v1589 = vpop.f32.mrb[0].mxu0
    %v1590 = vadd.f32 %v1495, %v1589
    %v1591 = vpop.f32.mrb[0].mxu0
    %v1592 = vadd.f32 %v1499, %v1591
    %v1593 = vpop.f32.mrb[0].mxu0
    %v1594 = vpop.f32.mrb[0].mxu0
    %1595 = vdwg.mxu0
    %1596 = vmatprep.subr.bf16.mxu0 %v1539
    %1597 = vmatpush1.bf16.msra.mxu0 %v1538
    %1598 = vmatprep.subr.bf16.mxu0 %v1543
    %1599 = vmatpush1.bf16.msra.mxu0 %v1542
    %1600 = vmatprep.subr.bf16.mxu0 0
    %1601 = vmatpush1.bf16.msra.mxu0 0
    %1602 = vmatprep.subr.bf16.mxu0 0
    %1603 = vmatpush1.bf16.msra.mxu0 0
    %1604 = vmatprep.subr.bf16.mxu0 0
    %1605 = vmatpush1.bf16.msra.mxu0 0
    %1606 = vmatprep.subr.bf16.mxu0 0
    %1607 = vmatpush1.bf16.msra.mxu0 0
    %1608 = vmatprep.subr.bf16.mxu0 0
    %1609 = vmatpush1.bf16.msra.mxu0 0
    %1610 = vmatprep.subr.bf16.mxu0 0
    %1611 = vmatpush1.bf16.msra.mxu0 0
    %1612 = vmatprep.subr.bf16.mxu0 0
    %1613 = vmatpush1.bf16.msra.mxu0 0
    %1614 = vmatprep.subr.bf16.mxu0 0
    %1615 = vmatpush1.bf16.msra.mxu0 0
    %1616 = vmatprep.subr.bf16.mxu0 0
    %1617 = vmatpush1.bf16.msra.mxu0 0
    %1618 = vmatprep.subr.bf16.mxu0 0
    %1619 = vmatpush1.bf16.msra.mxu0 0
    %1620 = vmatprep.subr.bf16.mxu0 0
    %1621 = vmatpush1.bf16.msra.mxu0 0
    %1622 = vmatprep.subr.bf16.mxu0 0
    %1623 = vmatpush1.bf16.msra.mxu0 0
    %1624 = vmatprep.subr.bf16.mxu0 0
    %1625 = vmatpush1.bf16.msra.mxu0 0
    %1626 = vmatprep.subr.bf16.mxu0 0
    %1627 = vmatpush1.bf16.msra.mxu0 0
    %1628 = vmatprep.mubr.bf16.mxu0 0
    %1629 = vmatmul.mubr.bf16.gmra.mrb[0].mxu0 %v1553
    %v1630 = vpop.f32.mrb[0].mxu0
    %v1631 = vadd.f32 %v1503, %v1630
    %v1632 = vpop.f32.mrb[0].mxu0
    %v1633 = vadd.f32 %v1507, %v1632
    %v1634 = vpop.f32.mrb[0].mxu0
    %v1635 = vpop.f32.mrb[0].mxu0
    %1636 = vdwg.mxu0
    %v1637 = vmax.f32 %v1590, 0.0
    %v1638 = vmax.f32 %v1592, 0.0
    %v1639 = vmax.f32 %v1631, 0.0
    %v1640 = vmax.f32 %v1633, 0.0
    %v1641 = vmax.f32 %v1637, %v1639
    %v1642 = vmax.f32 %v1638, %v1640
    %v1643 = vpack.c.bf16 %v1641, %v1641
    %v1644 = vpack.c.bf16 %v1642, %v1642
    %v1645 = vld [vmem:[%s4] sm:$0xf]
    %v1646 = vld [vmem:[%s4 + $0x4] sm:$0xf]
    %v1647 = vld [vmem:[%s4 + $0x8] sm:$0xf]
    %v1648 = vld [vmem:[%s4 + $0xc] sm:$0xf]
    %v1649 = vld [vmem:[%s4 + $0x10] sm:$0xf]
    %v1650 = vld [vmem:[%s4 + $0x14] sm:$0xf]
    %v1651 = vld [vmem:[%s4 + $0x18] sm:$0xf]
    %v1652 = vld [vmem:[%s4 + $0x1c] sm:$0xf]
    %v1653 = vld [vmem:[%s4 + $0x20] sm:$0xf]
    %v1654 = vld [vmem:[%s4 + $0x24] sm:$0xf]
    %v1655 = vld [vmem:[%s4 + $0x28] sm:$0xf]
    %v1656 = vld [vmem:[%s4 + $0x2c] sm:$0xf]
    %v1657 = vld [vmem:[%s4 + $0x30] sm:$0xf]
    %v1658 = vld [vmem:[%s4 + $0x34] sm:$0xf]
    %v1659 = vld [vmem:[%s4 + $0x38] sm:$0xf]
    %v1660 = vld [vmem:[%s4 + $0x3c] sm:$0xf]
    %v1661 = vld [vmem:[%s4 + $0x40] sm:$0xf]
    %v1662 = vld [vmem:[%s4 + $0x44] sm:$0xf]
    %v1663 = vld [vmem:[%s4 + $0x48] sm:$0xf]
    %v1664 = vld [vmem:[%s4 + $0x4c] sm:$0xf]
    %v1665 = vld [vmem:[%s4 + $0x50] sm:$0xf]
    %v1666 = vld [vmem:[%s4 + $0x54] sm:$0xf]
    %v1667 = vld [vmem:[%s4 + $0x58] sm:$0xf]
    %v1668 = vld [vmem:[%s4 + $0x5c] sm:$0xf]
    %v1669 = vld [vmem:[%s4 + $0x60] sm:$0xf]
    %v1670 = vld [vmem:[%s4 + $0x64] sm:$0xf]
    %v1671 = vld [vmem:[%s4 + $0x68] sm:$0xf]
    %v1672 = vld [vmem:[%s4 + $0x6c] sm:$0xf]
    %v1673 = vld [vmem:[%s4 + $0x70] sm:$0xf]
    %v1674 = vld [vmem:[%s4 + $0x74] sm:$0xf]
    %v1675 = vld [vmem:[%s4 + $0x78] sm:$0xf]
    %v1676 = vld [vmem:[%s4 + $0x7c] sm:$0xf]
    %v1677 = vlaneseq
    %v1678 = vshrl.u32 %v1677, 7
    %v1679 = vsub.s32 5, %v1678
    %v1680 = vrot.slane %v25, %v1679
    %v1713 = vunpack.c.l.b16 %v1645
    %v1714 = vunpack.c.l.b16 %v1646
    %v1715 = vunpack.c.l.b16 %v1647
    %v1716 = vunpack.c.l.b16 %v1648
    %v1717 = vunpack.c.l.b16 %v1649
    %v1718 = vunpack.c.l.b16 %v1650
    %v1719 = vunpack.c.l.b16 %v1651
    %v1720 = vunpack.c.l.b16 %v1652
    %v1721 = vunpack.c.l.b16 %v1653
    %v1722 = vunpack.c.l.b16 %v1654
    %v1723 = vunpack.c.l.b16 %v1655
    %v1724 = vunpack.c.l.b16 %v1656
    %v1725 = vunpack.c.l.b16 %v1657
    %v1726 = vunpack.c.l.b16 %v1658
    %v1727 = vunpack.c.l.b16 %v1659
    %v1728 = vunpack.c.l.b16 %v1660
    %v1729 = vunpack.c.l.b16 %v1661
    %v1730 = vunpack.c.l.b16 %v1662
    %v1731 = vunpack.c.l.b16 %v1663
    %v1732 = vunpack.c.l.b16 %v1664
    %v1733 = vunpack.c.l.b16 %v1665
    %v1734 = vunpack.c.l.b16 %v1666
    %v1735 = vunpack.c.l.b16 %v1667
    %v1736 = vunpack.c.l.b16 %v1668
    %v1737 = vunpack.c.l.b16 %v1669
    %v1738 = vunpack.c.l.b16 %v1670
    %v1739 = vunpack.c.l.b16 %v1671
    %v1740 = vunpack.c.l.b16 %v1672
    %v1741 = vunpack.c.l.b16 %v1673
    %v1742 = vunpack.c.l.b16 %v1674
    %v1743 = vunpack.c.l.b16 %v1675
    %v1744 = vunpack.c.l.b16 %v1676
    %v1745 = vpack.c.b16 %v1714, %v1713
    %v1746 = vpack.c.b16 %v1716, %v1715
    %v1747 = vpack.c.b16 %v1718, %v1717
    %v1748 = vpack.c.b16 %v1720, %v1719
    %v1749 = vpack.c.b16 %v1722, %v1721
    %v1750 = vpack.c.b16 %v1724, %v1723
    %v1751 = vpack.c.b16 %v1726, %v1725
    %v1752 = vpack.c.b16 %v1728, %v1727
    %v1753 = vpack.c.b16 %v1730, %v1729
    %v1754 = vpack.c.b16 %v1732, %v1731
    %v1755 = vpack.c.b16 %v1734, %v1733
    %v1756 = vpack.c.b16 %v1736, %v1735
    %v1757 = vpack.c.b16 %v1738, %v1737
    %v1758 = vpack.c.b16 %v1740, %v1739
    %v1759 = vpack.c.b16 %v1742, %v1741
    %v1760 = vpack.c.b16 %v1744, %v1743
    %1777 = vmatprep.subr.bf16.mxu0 0
    %1778 = vmatpush1.bf16.msra.mxu0 %v1745
    %1779 = vmatprep.subr.bf16.mxu0 0
    %1780 = vmatpush1.bf16.msra.mxu0 %v1746
    %1781 = vmatprep.subr.bf16.mxu0 0
    %1782 = vmatpush1.bf16.msra.mxu0 %v1747
    %1783 = vmatprep.subr.bf16.mxu0 0
    %1784 = vmatpush1.bf16.msra.mxu0 %v1748
    %1785 = vmatprep.subr.bf16.mxu0 0
    %1786 = vmatpush1.bf16.msra.mxu0 %v1749
    %1787 = vmatprep.subr.bf16.mxu0 0
    %1788 = vmatpush1.bf16.msra.mxu0 %v1750
    %1789 = vmatprep.subr.bf16.mxu0 0
    %1790 = vmatpush1.bf16.msra.mxu0 %v1751
    %1791 = vmatprep.subr.bf16.mxu0 0
    %1792 = vmatpush1.bf16.msra.mxu0 %v1752
    %1793 = vmatprep.subr.bf16.mxu0 0
    %1794 = vmatpush1.bf16.msra.mxu0 %v1753
    %1795 = vmatprep.subr.bf16.mxu0 0
    %1796 = vmatpush1.bf16.msra.mxu0 %v1754
    %1797 = vmatprep.subr.bf16.mxu0 0
    %1798 = vmatpush1.bf16.msra.mxu0 %v1755
    %1799 = vmatprep.subr.bf16.mxu0 0
    %1800 = vmatpush1.bf16.msra.mxu0 %v1756
    %1801 = vmatprep.subr.bf16.mxu0 0
    %1802 = vmatpush1.bf16.msra.mxu0 %v1757
    %1803 = vmatprep.subr.bf16.mxu0 0
    %1804 = vmatpush1.bf16.msra.mxu0 %v1758
    %1805 = vmatprep.subr.bf16.mxu0 0
    %1806 = vmatpush1.bf16.msra.mxu0 %v1759
    %1807 = vmatprep.subr.bf16.mxu0 0
    %1808 = vmatpush1.bf16.msra.mxu0 %v1760
    %1809 = vmatprep.mubr.bf16.mxu0 %v1644
    %1810 = vmatmul.mubr.bf16.gmra.mrb[0].mxu0 %v1643
    %v1811 = vpop.f32.mrb[0].mxu0
    %v1812 = vadd.f32 %v1680, %v1811
    %v1813 = vpop.f32.mrb[0].mxu0
    %v1814 = vpop.f32.mrb[0].mxu0
    %v1815 = vpop.f32.mrb[0].mxu0
    %1816 = vdwg.mxu0
    %v1817 = vmax.f32 %v1812, 0.0
    %v1818 = vpack.c.bf16 %v1817, %v1817
    %v1819 = vld [vmem:[%s5] sm:$0xf]
    %v1820 = vld [vmem:[%s5 + $0x4] sm:$0xf]
    %v1821 = vld [vmem:[%s5 + $0x8] sm:$0xf]
    %v1822 = vld [vmem:[%s5 + $0xc] sm:$0xf]
    %v1823 = vld [vmem:[%s5 + $0x10] sm:$0xf]
    %v1824 = vld [vmem:[%s5 + $0x14] sm:$0xf]
    %v1825 = vld [vmem:[%s5 + $0x18] sm:$0xf]
    %v1826 = vld [vmem:[%s5 + $0x1c] sm:$0xf]
    %v1827 = vlaneseq
    %v1828 = vshrl.u32 %v1827, 7
    %v1829 = vsub.s32 6, %v1828
    %v1830 = vrot.slane %v25, %v1829
    %v1839 = vunpack.c.l.b16 %v1819
    %v1840 = vunpack.c.l.b16 %v1820
    %v1841 = vunpack.c.l.b16 %v1821
    %v1842 = vunpack.c.l.b16 %v1822
    %v1843 = vunpack.c.l.b16 %v1823
    %v1844 = vunpack.c.l.b16 %v1824
    %v1845 = vunpack.c.l.b16 %v1825
    %v1846 = vunpack.c.l.b16 %v1826
    %v1847 = vpack.c.b16 %v1840, %v1839
    %v1848 = vpack.c.b16 %v1842, %v1841
    %v1849 = vpack.c.b16 %v1844, %v1843
    %v1850 = vpack.c.b16 %v1846, %v1845
    %vm1855 = vcmask 523264
    %v1857 = vsel %vm1855, %v1818, 0
    %1859 = vmatprep.subr.bf16.mxu0 0
    %1860 = vmatpush1.bf16.msra.mxu0 %v1847
    %1861 = vmatprep.subr.bf16.mxu0 0
    %1862 = vmatpush1.bf16.msra.mxu0 %v1848
    %1863 = vmatprep.subr.bf16.mxu0 0
    %1864 = vmatpush1.bf16.msra.mxu0 %v1849
    %1865 = vmatprep.subr.bf16.mxu0 0
    %1866 = vmatpush1.bf16.msra.mxu0 %v1850
    %1867 = vmatprep.subr.bf16.mxu0 0
    %1868 = vmatpush1.bf16.msra.mxu0 0
    %1869 = vmatprep.subr.bf16.mxu0 0
    %1870 = vmatpush1.bf16.msra.mxu0 0
    %1871 = vmatprep.subr.bf16.mxu0 0
    %1872 = vmatpush1.bf16.msra.mxu0 0
    %1873 = vmatprep.subr.bf16.mxu0 0
    %1874 = vmatpush1.bf16.msra.mxu0 0
    %1875 = vmatprep.subr.bf16.mxu0 0
    %1876 = vmatpush1.bf16.msra.mxu0 0
    %1877 = vmatprep.subr.bf16.mxu0 0
    %1878 = vmatpush1.bf16.msra.mxu0 0
    %1879 = vmatprep.subr.bf16.mxu0 0
    %1880 = vmatpush1.bf16.msra.mxu0 0
    %1881 = vmatprep.subr.bf16.mxu0 0
    %1882 = vmatpush1.bf16.msra.mxu0 0
    %1883 = vmatprep.subr.bf16.mxu0 0
    %1884 = vmatpush1.bf16.msra.mxu0 0
    %1885 = vmatprep.subr.bf16.mxu0 0
    %1886 = vmatpush1.bf16.msra.mxu0 0
    %1887 = vmatprep.subr.bf16.mxu0 0
    %1888 = vmatpush1.bf16.msra.mxu0 0
    %1889 = vmatprep.subr.bf16.mxu0 0
    %1890 = vmatpush1.bf16.msra.mxu0 0
    %1891 = vmatprep.mubr.bf16.mxu0 0
    %1892 = vmatmul.mubr.bf16.gmra.mrb[0].mxu0 %v1857
    %v1893 = vpop.f32.mrb[0].mxu0
    %v1894 = vadd.f32 %v1830, %v1893
    %v1895 = vpop.f32.mrb[0].mxu0
    %v1896 = vpop.f32.mrb[0].mxu0
    %v1897 = vpop.f32.mrb[0].mxu0
    %1898 = vdwg.mxu0
    %vm1899 = vcmask 25600
    %1900 = vst.msk [vmem:[#allocation2] sm:$0x3] %vm1899, %v1894
    // Predicated region
    $region26: #{pallas_forward.1} parent=1 // pred_check
      _
    $region27: #{pallas_forward.1} parent=1 // pred_check_branch
      %1902 = sbr.rel (0) target = $region29
    $region28: #{pallas_forward.1} parent=1 // pred_region
      %s1904 = ssub.s32 32, 32
      %1905 = vsyncadd [#allocation3], %s1904
      %s1907 = sshll.u32 [#allocation2], 4
      %s1908 = int_to_ptr.vmem [resolvable:$true] %s1907
      %1910 = dma.vmem_to_hbm [thread:$0]  %s1908, 32, %s6, [#allocation3]
    $region29: #{pallas_forward.1} parent=1 // pred_fallthru
      _
    // Predicated region
    $region30: #{pallas_forward.1} parent=1 // pred_check
      _
    $region31: #{pallas_forward.1} parent=1 // pred_check_branch
      %1912 = sbr.rel (0) target = $region33
    $region32: #{pallas_forward.1} parent=1 // pred_region
      %1913 = dma.done [#allocation3], 32
    $region33: #{pallas_forward.1} parent=1 // pred_fallthru
      _
    %1914 = vsyncpa [#allocation3], 1

</llo_original>
